<compile_context>
chip_gen: v5e
topology: v5e:2x2
jax: 0.10.0
libtpu: 0.0.40
codegen_flags: <defaults>
</compile_context>

<pallas_src>
import functools

import jax
import jax.numpy as jnp
import numpy as np
from jax.experimental import pallas as pl
from jax.experimental.pallas import tpu as pltpu

# TODO(synk): self.lstm and self.fc exist in __init__ but are never invoked in
#             the given forward() (which also has no return), so they are
#             intentionally not implemented.

_PAD = 8  # rows of zero padding around staged activations (one sublane tile)


# ------------------------------ kernel helpers ------------------------------

def _shifted_taps(x, pad_ref, seg_len):
    """Return (x_prev, x_next): x shifted by +1 / -1 rows within each segment.

    x       : (R, C) value, R = num_segments * seg_len rows.
    pad_ref : (R + 2*_PAD, C) VMEM scratch; x is staged at row offset _PAD with
              zero rows above/below, so x[t-1] / x[t+1] become offset reads.
    The first/last row of every length-`seg_len` segment is zeroed (Conv1d
    zero padding), which also stops halos leaking between batch elements.
    """
    R, C = x.shape
    pad_ref[pl.ds(0, _PAD), :] = jnp.zeros((_PAD, C), x.dtype)
    pad_ref[pl.ds(_PAD, R), :] = x
    pad_ref[pl.ds(_PAD + R, _PAD), :] = jnp.zeros((_PAD, C), x.dtype)

    pos = jax.lax.broadcasted_iota(jnp.int32, (R, C), 0) % seg_len
    x_prev = jnp.where(pos != 0, pad_ref[pl.ds(_PAD - 1, R), :], 0.0)
    x_next = jnp.where(pos != seg_len - 1, pad_ref[pl.ds(_PAD + 1, R), :], 0.0)
    return x_prev, x_next


def _conv1d_k3_relu(x, w_ref, b_ref, pad_ref, seg_len):
    """Conv1d(kernel=3, padding=1) + ReLU as a single fused MXU matmul.

    x: (R, Cin); w_ref: (3*Cin, Cout) with tap order [t-1 | t | t+1]; b_ref: (1, Cout).
    """
    x_prev, x_next = _shifted_taps(x, pad_ref, seg_len)
    x3 = jnp.concatenate([x_prev, x, x_next], axis=1)            # (R, 3*Cin)
    y = jnp.dot(x3, w_ref[...], preferred_element_type=jnp.float32) + b_ref[...]
    return jnp.maximum(y, 0.0)


def _maxpool2_rows(y, z_ref):
    """MaxPool1d(kernel=2, stride=2) along rows: (R, C) -> (R//2, C)."""
    R = y.shape[0]
    z_ref[...] = y
    even = z_ref[pl.ds(0, R // 2, stride=2), :]
    odd = z_ref[pl.ds(1, R // 2, stride=2), :]
    return jnp.maximum(even, odd)


def _cnn_kernel(x_ref, w1_ref, b1_ref, w2_ref, b2_ref, o_ref,
                xpad_ref, z1_ref, p1pad_ref, z2_ref, *, seg_len, tb):
    L, Lq = seg_len, seg_len // 4
    x = x_ref[...]                                               # (tb*L,   Cin)
    y1 = _conv1d_k3_relu(x, w1_ref, b1_ref, xpad_ref, L)         # (tb*L,   16)
    p1 = _maxpool2_rows(y1, z1_ref)                              # (tb*L/2, 16)
    y2 = _conv1d_k3_relu(p1, w2_ref, b2_ref, p1pad_ref, L // 2)  # (tb*L/2, 32)
    p2 = _maxpool2_rows(y2, z2_ref)                              # (tb*L/4, 32)
    # Emit PyTorch NCL layout: per batch element, (L//4, 32) -> (32, L//4).
    for s in range(tb):
        o_ref[s] = p2[s * Lq:(s + 1) * Lq, :].T.astype(o_ref.dtype)


# --------------------------------- wrapper ----------------------------------

def _pick_tb(B, L, target_rows=512):
    """Batch elements folded per grid step: fill the MXU M dim (~target_rows)
    while keeping >= 2 grid steps so both v7x TensorCores get work."""
    tb = max(1, min(B, target_rows // max(L, 1)))
    while B % tb:
        tb -= 1
    while tb > 1 and B // tb < 2:
        tb -= 1
        while B % tb:
            tb -= 1
    return max(tb, 1)


def cnn_lstm_embedding_forward(x, w1, b1, w2, b2, *, tb=None):
    """x: (B, L, C_in) float32 (PyTorch batch_first). Returns (B, 32, L//4) NCL."""
    B, L, C_in = x.shape
    assert L % 4 == 0, "length must be divisible by 4 (two MaxPool1d(2))"
    C1 = w1.shape[0]   # 16
    C2 = w2.shape[0]   # 32
    Lq = L // 4

    if tb is None:
        tb = _pick_tb(B, L)
    assert B % tb == 0
    M = tb * L                         # rows (sublanes) processed per grid step
    assert M % 8 == 0 or tb == B       # keep the (8,128) block constraint happy

    # PyTorch Conv1d weight is (out, in, k); fuse the 3 taps into one matmul:
    # fused-weight rows are ordered [k=0 (t-1) | k=1 (t) | k=2 (t+1)].
    w1f = jnp.transpose(w1, (2, 1, 0)).reshape(3 * C_in, C1).astype(jnp.float32)
    w2f = jnp.transpose(w2, (2, 1, 0)).reshape(3 * C1, C2).astype(jnp.float32)
    b1k = b1.reshape(1, C1).astype(jnp.float32)
    b2k = b2.reshape(1, C2).astype(jnp.float32)

    # Flatten batch into rows: (B, L, Cin) -> (B*L, Cin); each grid step takes a
    # (tb*L, Cin) slab (tb length-L segments stacked along the sublane axis).
    x2 = x.astype(jnp.float32).reshape(B * L, C_in)

    kernel = functools.partial(_cnn_kernel, seg_len=L, tb=tb)
    out = pl.pallas_call(
        kernel,
        out_shape=jax.ShapeDtypeStruct((B, C2, Lq), jnp.float32),
        grid=(B // tb,),
        in_specs=[
            pl.BlockSpec((M, C_in), lambda g: (g, 0)),
            # Constant index maps -> weights/biases stay resident in VMEM.
            pl.BlockSpec((3 * C_in, C1), lambda g: (0, 0)),
            pl.BlockSpec((1, C1), lambda g: (0, 0)),
            pl.BlockSpec((3 * C1, C2), lambda g: (0, 0)),
            pl.BlockSpec((1, C2), lambda g: (0, 0)),
        ],
        out_specs=pl.BlockSpec((tb, C2, Lq), lambda g: (g, 0, 0)),
        scratch_shapes=[
            pltpu.VMEM((M + 2 * _PAD, C_in), jnp.float32),     # conv1 tap staging
            pltpu.VMEM((M, C1), jnp.float32),                  # pool1 staging
            pltpu.VMEM((M // 2 + 2 * _PAD, C1), jnp.float32),  # conv2 tap staging
            pltpu.VMEM((M // 2, C2), jnp.float32),             # pool2 staging
        ],
        compiler_params=pltpu.CompilerParams(
            dimension_semantics=("parallel",)),
    )(x2, w1f, b1k, w2f, b2k)
    return out


# --------------------------- pure-JAX reference ------------------------------

def _ref_forward(x, w1, b1, w2, b2):
    xc = jnp.transpose(x, (0, 2, 1))  # (B, C, L)  == x.transpose(1,2) in torch

    def conv_relu(inp, w, b):
        y = jax.lax.conv_general_dilated(
            inp, w, window_strides=(1,), padding=[(1, 1)],
            dimension_numbers=("NCH", "OIH", "NCH"))
        return jax.nn.relu(y + b[None, :, None])

    def pool(inp):
        B, C, L = inp.shape
        return inp.reshape(B, C, L // 2, 2).max(axis=-1)

    y = pool(conv_relu(xc, w1, b1))
    y = pool(conv_relu(y, w2, b2))
    return y  # (B, 32, L//4)


# ----------------------------------- main ------------------------------------

if __name__ == "__main__":
    B, L, C_in = 4, 64, 4   # input_length=64, num_channels=4

    key = jax.random.PRNGKey(0)
    k_x, k_w1, k_b1, k_w2, k_b2 = jax.random.split(key, 5)

    x = jax.random.normal(k_x, (B, L, C_in), dtype=jnp.float32)

    # Deterministic synthetic parameters (same shapes as the PyTorch module).
    w1 = 0.1 * jax.random.normal(k_w1, (16, C_in, 3), dtype=jnp.float32)
    b1 = 0.1 * jax.random.normal(k_b1, (16,), dtype=jnp.float32)
    w2 = 0.1 * jax.random.normal(k_w2, (32, 16, 3), dtype=jnp.float32)
    b2 = 0.1 * jax.random.normal(k_b2, (32,), dtype=jnp.float32)

    out = jax.block_until_ready(cnn_lstm_embedding_forward(x, w1, b1, w2, b2))
    ref = jax.block_until_ready(_ref_forward(x, w1, b1, w2, b2))

    assert out.shape == (B, 32, L // 4), out.shape
    np.testing.assert_allclose(np.asarray(out), np.asarray(ref), rtol=1e-5, atol=1e-5)
    print("KERNEL_OK")
</pallas_src>

<mosaic_0001>
module attributes {stable_mosaic.version = 11 : i64} {
  func.func @_cnn_kernel(%arg0: i32, %arg1: memref<128x4xf32, #tpu.memory_space<vmem>>, %arg2: memref<12x16xf32, #tpu.memory_space<vmem>>, %arg3: memref<1x16xf32, #tpu.memory_space<vmem>>, %arg4: memref<48x32xf32, #tpu.memory_space<vmem>>, %arg5: memref<1x32xf32, #tpu.memory_space<vmem>>, %arg6: memref<2x32x16xf32, #tpu.memory_space<vmem>>, %arg7: memref<144x4xf32, #tpu.memory_space<vmem>>, %arg8: memref<128x16xf32, #tpu.memory_space<vmem>>, %arg9: memref<80x16xf32, #tpu.memory_space<vmem>>, %arg10: memref<64x32xf32, #tpu.memory_space<vmem>>) attributes {dimension_semantics = [#tpu.dimension_semantics<parallel>], iteration_bounds = array<i64: 2>, scalar_prefetch = 0 : i64, scratch_operands = 4 : i64, tpu.core_type = #tpu.core_type<tc>, window_params = [{transform_indices = @transform_0, window_bounds = array<i64: 128, 4>}, {pipeline_mode = #tpu.pipeline_mode<synchronous>, transform_indices = @transform_1, window_bounds = array<i64: 12, 16>}, {pipeline_mode = #tpu.pipeline_mode<synchronous>, transform_indices = @transform_2, window_bounds = array<i64: 1, 16>}, {pipeline_mode = #tpu.pipeline_mode<synchronous>, transform_indices = @transform_3, window_bounds = array<i64: 48, 32>}, {pipeline_mode = #tpu.pipeline_mode<synchronous>, transform_indices = @transform_4, window_bounds = array<i64: 1, 32>}, {transform_indices = @transform_5, window_bounds = array<i64: 2, 32, 16>}]} {
    %c0 = arith.constant 0 : index
    %c0_0 = arith.constant 0 : index
    %0 = vector.load %arg1[%c0, %c0_0] : memref<128x4xf32, #tpu.memory_space<vmem>>, vector<128x4xf32>
    %cst = arith.constant 0.000000e+00 : f32
    %1 = vector.broadcast %cst : f32 to vector<8x4xf32>
    %c0_1 = arith.constant 0 : index
    %c0_2 = arith.constant 0 : index
    %2 = vector.load %arg7[%c0_1, %c0_2] : memref<144x4xf32, #tpu.memory_space<vmem>>, vector<8x4xf32>
    tpu.vector_store %arg7[%c0_1, %c0_2], %1 {strides = array<i32>} : memref<144x4xf32, #tpu.memory_space<vmem>>, vector<8x4xf32>,
    %c8 = arith.constant 8 : index
    %c0_3 = arith.constant 0 : index
    %3 = vector.load %arg7[%c8, %c0_3] : memref<144x4xf32, #tpu.memory_space<vmem>>, vector<128x4xf32>
    tpu.vector_store %arg7[%c8, %c0_3], %0 {strides = array<i32>} : memref<144x4xf32, #tpu.memory_space<vmem>>, vector<128x4xf32>,
    %cst_4 = arith.constant 0.000000e+00 : f32
    %4 = vector.broadcast %cst_4 : f32 to vector<8x4xf32>
    %c136 = arith.constant 136 : index
    %c0_5 = arith.constant 0 : index
    %5 = vector.load %arg7[%c136, %c0_5] : memref<144x4xf32, #tpu.memory_space<vmem>>, vector<8x4xf32>
    tpu.vector_store %arg7[%c136, %c0_5], %4 {strides = array<i32>} : memref<144x4xf32, #tpu.memory_space<vmem>>, vector<8x4xf32>,
    %6 = tpu.iota {dimensions = array<i32: 0>} : vector<128x4xi32>
    %c64_i32 = arith.constant 64 : i32
    %c0_i32 = arith.constant 0 : i32
    %7 = arith.cmpi eq, %c64_i32, %c0_i32 : i32
    %c1_i32 = arith.constant 1 : i32
    %8 = arith.select %7, %c1_i32, %c64_i32 : i32
    %9 = vector.broadcast %8 : i32 to vector<128x4xi32>
    %10 = arith.remsi %6, %9 : vector<128x4xi32>
    %c0_i32_6 = arith.constant 0 : i32
    %11 = vector.broadcast %c0_i32_6 : i32 to vector<128x4xi32>
    %12 = arith.cmpi ne, %10, %11 : vector<128x4xi32>
    %c0_i32_7 = arith.constant 0 : i32
    %13 = vector.broadcast %c0_i32_7 : i32 to vector<128x4xi32>
    %14 = arith.cmpi slt, %10, %13 : vector<128x4xi32>
    %c0_i32_8 = arith.constant 0 : i32
    %15 = arith.cmpi slt, %8, %c0_i32_8 : i32
    %16 = vector.broadcast %15 : i1 to vector<128x4xi1>
    %17 = vector.broadcast %16 : vector<128x4xi1> to vector<128x4xi1>
    %18 = arith.xori %14, %17 : vector<128x4xi1>
    %19 = arith.andi %18, %12 : vector<128x4xi1>
    %20 = vector.broadcast %8 : i32 to vector<128x4xi32>
    %21 = arith.addi %10, %20 : vector<128x4xi32>
    %22 = arith.select %19, %21, %10 : vector<128x4xi1>, vector<128x4xi32>
    %c0_i32_9 = arith.constant 0 : i32
    %23 = vector.broadcast %c0_i32_9 : i32 to vector<128x4xi32>
    %24 = arith.cmpi ne, %22, %23 : vector<128x4xi32>
    %c7 = arith.constant 7 : index
    %c0_10 = arith.constant 0 : index
    %25 = vector.load %arg7[%c7, %c0_10] : memref<144x4xf32, #tpu.memory_space<vmem>>, vector<128x4xf32>
    %cst_11 = arith.constant 0.000000e+00 : f32
    %26 = vector.broadcast %cst_11 : f32 to vector<128x4xf32>
    %27 = arith.select %24, %25, %26 : vector<128x4xi1>, vector<128x4xf32>
    %c63_i32 = arith.constant 63 : i32
    %28 = vector.broadcast %c63_i32 : i32 to vector<128x4xi32>
    %29 = arith.cmpi ne, %22, %28 : vector<128x4xi32>
    %c9 = arith.constant 9 : index
    %c0_12 = arith.constant 0 : index
    %30 = vector.load %arg7[%c9, %c0_12] : memref<144x4xf32, #tpu.memory_space<vmem>>, vector<128x4xf32>
    %cst_13 = arith.constant 0.000000e+00 : f32
    %31 = vector.broadcast %cst_13 : f32 to vector<128x4xf32>
    %32 = arith.select %29, %30, %31 : vector<128x4xi1>, vector<128x4xf32>
    %33 = tpu.concatenate %27, %0, %32 in 1 : vector<128x4xf32>, vector<128x4xf32>, vector<128x4xf32> -> vector<128x12xf32>
    %c0_14 = arith.constant 0 : index
    %c0_15 = arith.constant 0 : index
    %34 = vector.load %arg2[%c0_14, %c0_15] : memref<12x16xf32, #tpu.memory_space<vmem>>, vector<12x16xf32>
    %cst_16 = arith.constant dense<0.000000e+00> : vector<128x16xf32>
    %35 = tpu.matmul %33, %34, %cst_16 {dimension_numbers = #tpu.dot_dimension_numbers<[1], [0], [0], [1], [0, 0, 1, 1], [], []>} : vector<128x12xf32>, vector<12x16xf32>, vector<128x16xf32> -> vector<128x16xf32>
    %c0_17 = arith.constant 0 : index
    %c0_18 = arith.constant 0 : index
    %36 = vector.load %arg3[%c0_17, %c0_18] : memref<1x16xf32, #tpu.memory_space<vmem>>, vector<1x16xf32>
    %37 = vector.broadcast %36 : vector<1x16xf32> to vector<128x16xf32>
    %38 = arith.addf %35, %37 : vector<128x16xf32>
    %cst_19 = arith.constant 0.000000e+00 : f32
    %39 = vector.broadcast %cst_19 : f32 to vector<128x16xf32>
    %40 = arith.maximumf %38, %39 : vector<128x16xf32>
    %c0_20 = arith.constant 0 : index
    %c0_21 = arith.constant 0 : index
    %41 = vector.load %arg8[%c0_20, %c0_21] : memref<128x16xf32, #tpu.memory_space<vmem>>, vector<128x16xf32>
    tpu.vector_store %arg8[%c0_20, %c0_21], %40 {strides = array<i32>} : memref<128x16xf32, #tpu.memory_space<vmem>>, vector<128x16xf32>,
    %c0_22 = arith.constant 0 : index
    %c0_23 = arith.constant 0 : index
    %42 = tpu.strided_load %arg8[%c0_22, %c0_23] {strides = array<i32: 2, 1>} : memref<128x16xf32, #tpu.memory_space<vmem>>, vector<64x16xf32>
    %c1 = arith.constant 1 : index
    %c0_24 = arith.constant 0 : index
    %43 = tpu.strided_load %arg8[%c1, %c0_24] {strides = array<i32: 2, 1>} : memref<128x16xf32, #tpu.memory_space<vmem>>, vector<64x16xf32>
    %44 = arith.maximumf %42, %43 : vector<64x16xf32>
    %cst_25 = arith.constant 0.000000e+00 : f32
    %45 = vector.broadcast %cst_25 : f32 to vector<8x16xf32>
    %c0_26 = arith.constant 0 : index
    %c0_27 = arith.constant 0 : index
    %46 = vector.load %arg9[%c0_26, %c0_27] : memref<80x16xf32, #tpu.memory_space<vmem>>, vector<8x16xf32>
    tpu.vector_store %arg9[%c0_26, %c0_27], %45 {strides = array<i32>} : memref<80x16xf32, #tpu.memory_space<vmem>>, vector<8x16xf32>,
    %c8_28 = arith.constant 8 : index
    %c0_29 = arith.constant 0 : index
    %47 = vector.load %arg9[%c8_28, %c0_29] : memref<80x16xf32, #tpu.memory_space<vmem>>, vector<64x16xf32>
    tpu.vector_store %arg9[%c8_28, %c0_29], %44 {strides = array<i32>} : memref<80x16xf32, #tpu.memory_space<vmem>>, vector<64x16xf32>,
    %cst_30 = arith.constant 0.000000e+00 : f32
    %48 = vector.broadcast %cst_30 : f32 to vector<8x16xf32>
    %c72 = arith.constant 72 : index
    %c0_31 = arith.constant 0 : index
    %49 = vector.load %arg9[%c72, %c0_31] : memref<80x16xf32, #tpu.memory_space<vmem>>, vector<8x16xf32>
    tpu.vector_store %arg9[%c72, %c0_31], %48 {strides = array<i32>} : memref<80x16xf32, #tpu.memory_space<vmem>>, vector<8x16xf32>,
    %50 = tpu.iota {dimensions = array<i32: 0>} : vector<64x16xi32>
    %c32_i32 = arith.constant 32 : i32
    %c0_i32_32 = arith.constant 0 : i32
    %51 = arith.cmpi eq, %c32_i32, %c0_i32_32 : i32
    %c1_i32_33 = arith.constant 1 : i32
    %52 = arith.select %51, %c1_i32_33, %c32_i32 : i32
    %53 = vector.broadcast %52 : i32 to vector<64x16xi32>
    %54 = arith.remsi %50, %53 : vector<64x16xi32>
    %c0_i32_34 = arith.constant 0 : i32
    %55 = vector.broadcast %c0_i32_34 : i32 to vector<64x16xi32>
    %56 = arith.cmpi ne, %54, %55 : vector<64x16xi32>
    %c0_i32_35 = arith.constant 0 : i32
    %57 = vector.broadcast %c0_i32_35 : i32 to vector<64x16xi32>
    %58 = arith.cmpi slt, %54, %57 : vector<64x16xi32>
    %c0_i32_36 = arith.constant 0 : i32
    %59 = arith.cmpi slt, %52, %c0_i32_36 : i32
    %60 = vector.broadcast %59 : i1 to vector<64x16xi1>
    %61 = vector.broadcast %60 : vector<64x16xi1> to vector<64x16xi1>
    %62 = arith.xori %58, %61 : vector<64x16xi1>
    %63 = arith.andi %62, %56 : vector<64x16xi1>
    %64 = vector.broadcast %52 : i32 to vector<64x16xi32>
    %65 = arith.addi %54, %64 : vector<64x16xi32>
    %66 = arith.select %63, %65, %54 : vector<64x16xi1>, vector<64x16xi32>
    %c0_i32_37 = arith.constant 0 : i32
    %67 = vector.broadcast %c0_i32_37 : i32 to vector<64x16xi32>
    %68 = arith.cmpi ne, %66, %67 : vector<64x16xi32>
    %c7_38 = arith.constant 7 : index
    %c0_39 = arith.constant 0 : index
    %69 = vector.load %arg9[%c7_38, %c0_39] : memref<80x16xf32, #tpu.memory_space<vmem>>, vector<64x16xf32>
    %cst_40 = arith.constant 0.000000e+00 : f32
    %70 = vector.broadcast %cst_40 : f32 to vector<64x16xf32>
    %71 = arith.select %68, %69, %70 : vector<64x16xi1>, vector<64x16xf32>
    %c31_i32 = arith.constant 31 : i32
    %72 = vector.broadcast %c31_i32 : i32 to vector<64x16xi32>
    %73 = arith.cmpi ne, %66, %72 : vector<64x16xi32>
    %c9_41 = arith.constant 9 : index
    %c0_42 = arith.constant 0 : index
    %74 = vector.load %arg9[%c9_41, %c0_42] : memref<80x16xf32, #tpu.memory_space<vmem>>, vector<64x16xf32>
    %cst_43 = arith.constant 0.000000e+00 : f32
    %75 = vector.broadcast %cst_43 : f32 to vector<64x16xf32>
    %76 = arith.select %73, %74, %75 : vector<64x16xi1>, vector<64x16xf32>
    %77 = tpu.concatenate %71, %44, %76 in 1 : vector<64x16xf32>, vector<64x16xf32>, vector<64x16xf32> -> vector<64x48xf32>
    %c0_44 = arith.constant 0 : index
    %c0_45 = arith.constant 0 : index
    %78 = vector.load %arg4[%c0_44, %c0_45] : memref<48x32xf32, #tpu.memory_space<vmem>>, vector<48x32xf32>
    %cst_46 = arith.constant dense<0.000000e+00> : vector<64x32xf32>
    %79 = tpu.matmul %77, %78, %cst_46 {dimension_numbers = #tpu.dot_dimension_numbers<[1], [0], [0], [1], [0, 0, 1, 1], [], []>} : vector<64x48xf32>, vector<48x32xf32>, vector<64x32xf32> -> vector<64x32xf32>
    %c0_47 = arith.constant 0 : index
    %c0_48 = arith.constant 0 : index
    %80 = vector.load %arg5[%c0_47, %c0_48] : memref<1x32xf32, #tpu.memory_space<vmem>>, vector<1x32xf32>
    %81 = vector.broadcast %80 : vector<1x32xf32> to vector<64x32xf32>
    %82 = arith.addf %79, %81 : vector<64x32xf32>
    %cst_49 = arith.constant 0.000000e+00 : f32
    %83 = vector.broadcast %cst_49 : f32 to vector<64x32xf32>
    %84 = arith.maximumf %82, %83 : vector<64x32xf32>
    %c0_50 = arith.constant 0 : index
    %c0_51 = arith.constant 0 : index
    %85 = vector.load %arg10[%c0_50, %c0_51] : memref<64x32xf32, #tpu.memory_space<vmem>>, vector<64x32xf32>
    tpu.vector_store %arg10[%c0_50, %c0_51], %84 {strides = array<i32>} : memref<64x32xf32, #tpu.memory_space<vmem>>, vector<64x32xf32>,
    %c0_52 = arith.constant 0 : index
    %c0_53 = arith.constant 0 : index
    %86 = tpu.strided_load %arg10[%c0_52, %c0_53] {strides = array<i32: 2, 1>} : memref<64x32xf32, #tpu.memory_space<vmem>>, vector<32x32xf32>
    %c1_54 = arith.constant 1 : index
    %c0_55 = arith.constant 0 : index
    %87 = tpu.strided_load %arg10[%c1_54, %c0_55] {strides = array<i32: 2, 1>} : memref<64x32xf32, #tpu.memory_space<vmem>>, vector<32x32xf32>
    %88 = arith.maximumf %86, %87 : vector<32x32xf32>
    %89 = vector.extract_strided_slice %88 {offsets = [0, 0], sizes = [16, 32], strides = [1, 1]} : vector<32x32xf32> to vector<16x32xf32>
    %90 = tpu.transpose %89, [1, 0] : vector<16x32xf32> -> vector<32x16xf32>
    %c0_56 = arith.constant 0 : index
    %c0_57 = arith.constant 0 : index
    %c0_58 = arith.constant 0 : index
    %91 = vector.load %arg6[%c0_56, %c0_57, %c0_58] : memref<2x32x16xf32, #tpu.memory_space<vmem>>, vector<1x32x16xf32>
    %92 = vector.shape_cast %91 : vector<1x32x16xf32> to vector<32x16xf32>
    %93 = vector.shape_cast %90 : vector<32x16xf32> to vector<1x32x16xf32>
    tpu.vector_store %arg6[%c0_56, %c0_57, %c0_58], %93 {strides = array<i32>} : memref<2x32x16xf32, #tpu.memory_space<vmem>>, vector<1x32x16xf32>,
    %94 = vector.extract_strided_slice %88 {offsets = [16, 0], sizes = [16, 32], strides = [1, 1]} : vector<32x32xf32> to vector<16x32xf32>
    %95 = tpu.transpose %94, [1, 0] : vector<16x32xf32> -> vector<32x16xf32>
    %c1_59 = arith.constant 1 : index
    %c0_60 = arith.constant 0 : index
    %c0_61 = arith.constant 0 : index
    %96 = vector.load %arg6[%c1_59, %c0_60, %c0_61] : memref<2x32x16xf32, #tpu.memory_space<vmem>>, vector<1x32x16xf32>
    %97 = vector.shape_cast %96 : vector<1x32x16xf32> to vector<32x16xf32>
    %98 = vector.shape_cast %95 : vector<32x16xf32> to vector<1x32x16xf32>
    tpu.vector_store %arg6[%c1_59, %c0_60, %c0_61], %98 {strides = array<i32>} : memref<2x32x16xf32, #tpu.memory_space<vmem>>, vector<1x32x16xf32>,
    return
  }
  func.func @transform_0(%arg0: i32) -> (i32, i32) {
    %c0_i32 = arith.constant 0 : i32
    %c0_i32_0 = arith.constant 0 : i32
    return %arg0, %c0_i32 : i32, i32
  }
  func.func @transform_1(%arg0: i32) -> (i32, i32) {
    %c0_i32 = arith.constant 0 : i32
    %c0_i32_0 = arith.constant 0 : i32
    %c0_i32_1 = arith.constant 0 : i32
    return %c0_i32, %c0_i32_0 : i32, i32
  }
  func.func @transform_2(%arg0: i32) -> (i32, i32) {
    %c0_i32 = arith.constant 0 : i32
    %c0_i32_0 = arith.constant 0 : i32
    %c0_i32_1 = arith.constant 0 : i32
    return %c0_i32, %c0_i32_0 : i32, i32
  }
  func.func @transform_3(%arg0: i32) -> (i32, i32) {
    %c0_i32 = arith.constant 0 : i32
    %c0_i32_0 = arith.constant 0 : i32
    %c0_i32_1 = arith.constant 0 : i32
    return %c0_i32, %c0_i32_0 : i32, i32
  }
  func.func @transform_4(%arg0: i32) -> (i32, i32) {
    %c0_i32 = arith.constant 0 : i32
    %c0_i32_0 = arith.constant 0 : i32
    %c0_i32_1 = arith.constant 0 : i32
    return %c0_i32, %c0_i32_0 : i32, i32
  }
  func.func @transform_5(%arg0: i32) -> (i32, i32, i32) {
    %c0_i32 = arith.constant 0 : i32
    %c0_i32_0 = arith.constant 0 : i32
    %c0_i32_1 = arith.constant 0 : i32
    return %arg0, %c0_i32, %c0_i32_0 : i32, i32, i32
  }
}

</mosaic_0001>

<llo_original>
// kernel: tpu_custom_call.1
$region0: #{tpu_custom_call.1}
  #allocation0 [shape = 'u32[]', space=smem, size = 0x4, offset = 0x4, fixed_abs, tag = 'smem constant byte address 0x4 - core index']
  #allocation1 [shape = 'u32[72,128]{1,0:T(1,128)}', space=vmem, size = 0x9000, scoped, tag = 'internal scratch']
  #allocation2 [shape = 'f32[144,4]{1,0:T(8,128)}', space=vmem, size = 0x12000, scoped, tag = 'scratch operand']
  #allocation3 [shape = 'f32[128,16]{1,0:T(8,128)}', space=vmem, size = 0x10000, scoped, tag = 'scratch operand']
  #allocation4 [shape = 'f32[80,16]{1,0:T(8,128)}', space=vmem, size = 0xa000, scoped, tag = 'scratch operand']
  #allocation5 [shape = 'f32[64,32]{1,0:T(8,128)}', space=vmem, size = 0x8000, scoped, tag = 'scratch operand']
  %s0 = inlined_call_operand.vmem [shape: f32[256,4], index: 0, kind: input, shape index: {}]
  %s1 = inlined_call_operand.vmem [shape: f32[12,16], index: 1, kind: input, shape index: {}]
  %s2 = inlined_call_operand.vmem [shape: f32[1,16], index: 2, kind: input, shape index: {}]
  %s3 = inlined_call_operand.vmem [shape: f32[48,32], index: 3, kind: input, shape index: {}]
  %s4 = inlined_call_operand.vmem [shape: f32[1,32], index: 4, kind: input, shape index: {}]
  %s5 = inlined_call_operand.vmem [shape: f32[4,32,16], index: 5, kind: output, shape index: {}]
  %s6 = sld [smem:[#allocation0]]
  $region53: #{tpu_custom_call.1} parent=0
    _
  %s8 = ssub.s32 1, %s6
  %s9 = scalar_select 0, %s8, %s6
  loop: start=0, step=1, limit=4
  $region2: #{tpu_custom_call.1} parent=0 // loop_pre_header
    _
  $region3: #{tpu_custom_call.1} parent=0 // loop_header
    %s11 = sphi 0, %s15
    %p12 = scmp.ge.s32.totalorder %s11, 4
    %s21 = sphi 0, %s23
    %s24 = sphi 0, %s21
    %s25 = sphi 0, %s24
    %s41 = sphi 0, %s25
    %s45 = sphi 0, %s45
    %s47 = sphi 0, %s45
    %s48 = sphi 0, %s47
    %s62 = sphi 0, %s48
    %s66 = sphi 0, %s66
    %s68 = sphi 0, %s66
    %s69 = sphi 0, %s68
    %s83 = sphi 0, %s69
    %s87 = sphi 0, %s87
    %s89 = sphi 0, %s87
    %s90 = sphi 0, %s89
    %s104 = sphi 0, %s90
    %s108 = sphi 0, %s108
    %s110 = sphi 0, %s108
    %s111 = sphi 0, %s110
    %s125 = sphi 0, %s111
    %s131 = sphi 0, %s133
    %s134 = sphi 0, %s131
    %s135 = sphi 0, %s134
    %s151 = sphi 0, %s135
  $region4: #{tpu_custom_call.1} parent=0 // loop_header_branch
    %14 = sbr.rel (%p12) target = $region8
  $region5: #{tpu_custom_call.1} parent=0 // loop_body
    %s16 = ssub.s32 %s11, 1
    %s17 = ssub.s32 %s11, 2
    %s18 = sadd.s32 %s11, 1
    %s19 = ssub.s32 %s11, %s18
    %p20 = scmp.eq.s32.totalorder %s19, 0
    %s22 = sadd.s32 %s21, 1
    %s23 = scalar_select %p20, %s21, %s22
    %p26 = pneg %p20
    %p27 = scmp.eq.s32.totalorder %s11, 1
    %p28 = por %p26, %p27
    %p29 = scmp.ne.s32.totalorder %s21, %s24
    %p30 = scmp.eq.s32.totalorder %s11, 0
    %p31 = por %p29, %p30
    %p32 = scmp.ne.s32.totalorder %s21, %s24
    %p33 = scmp.eq.s32.totalorder %s16, 1
    %p34 = por %p32, %p33
    %p35 = scmp.ne.s32.totalorder %s24, %s25
    %p36 = scmp.eq.s32.totalorder %s16, 0
    %p37 = por %p35, %p36
    %p38 = scmp.ne.s32.totalorder %s24, %s25
    %p39 = scmp.eq.s32.totalorder %s17, 1
    %p40 = por %p38, %p39
    %p42 = scmp.ne.s32.totalorder %s25, %s41
    %p43 = scmp.eq.s32.totalorder %s17, 0
    %p44 = por %p42, %p43
    %s46 = sadd.s32 %s45, 1
    %p49 = scmp.eq.s32.totalorder %s11, 1
    %p50 = scmp.ne.s32.totalorder %s45, %s47
    %p51 = scmp.eq.s32.totalorder %s11, 0
    %p52 = por %p50, %p51
    %p53 = scmp.ne.s32.totalorder %s45, %s47
    %p54 = scmp.eq.s32.totalorder %s16, 1
    %p55 = por %p53, %p54
    %p56 = scmp.ne.s32.totalorder %s47, %s48
    %p57 = scmp.eq.s32.totalorder %s16, 0
    %p58 = por %p56, %p57
    %p59 = scmp.ne.s32.totalorder %s47, %s48
    %p60 = scmp.eq.s32.totalorder %s17, 1
    %p61 = por %p59, %p60
    %p63 = scmp.ne.s32.totalorder %s48, %s62
    %p64 = scmp.eq.s32.totalorder %s17, 0
    %p65 = por %p63, %p64
    %s67 = sadd.s32 %s66, 1
    %p70 = scmp.eq.s32.totalorder %s11, 1
    %p71 = scmp.ne.s32.totalorder %s66, %s68
    %p72 = scmp.eq.s32.totalorder %s11, 0
    %p73 = por %p71, %p72
    %p74 = scmp.ne.s32.totalorder %s66, %s68
    %p75 = scmp.eq.s32.totalorder %s16, 1
    %p76 = por %p74, %p75
    %p77 = scmp.ne.s32.totalorder %s68, %s69
    %p78 = scmp.eq.s32.totalorder %s16, 0
    %p79 = por %p77, %p78
    %p80 = scmp.ne.s32.totalorder %s68, %s69
    %p81 = scmp.eq.s32.totalorder %s17, 1
    %p82 = por %p80, %p81
    %p84 = scmp.ne.s32.totalorder %s69, %s83
    %p85 = scmp.eq.s32.totalorder %s17, 0
    %p86 = por %p84, %p85
    %s88 = sadd.s32 %s87, 1
    %p91 = scmp.eq.s32.totalorder %s11, 1
    %p92 = scmp.ne.s32.totalorder %s87, %s89
    %p93 = scmp.eq.s32.totalorder %s11, 0
    %p94 = por %p92, %p93
    %p95 = scmp.ne.s32.totalorder %s87, %s89
    %p96 = scmp.eq.s32.totalorder %s16, 1
    %p97 = por %p95, %p96
    %p98 = scmp.ne.s32.totalorder %s89, %s90
    %p99 = scmp.eq.s32.totalorder %s16, 0
    %p100 = por %p98, %p99
    %p101 = scmp.ne.s32.totalorder %s89, %s90
    %p102 = scmp.eq.s32.totalorder %s17, 1
    %p103 = por %p101, %p102
    %p105 = scmp.ne.s32.totalorder %s90, %s104
    %p106 = scmp.eq.s32.totalorder %s17, 0
    %p107 = por %p105, %p106
    %s109 = sadd.s32 %s108, 1
    %p112 = scmp.eq.s32.totalorder %s11, 1
    %p113 = scmp.ne.s32.totalorder %s108, %s110
    %p114 = scmp.eq.s32.totalorder %s11, 0
    %p115 = por %p113, %p114
    %p116 = scmp.ne.s32.totalorder %s108, %s110
    %p117 = scmp.eq.s32.totalorder %s16, 1
    %p118 = por %p116, %p117
    %p119 = scmp.ne.s32.totalorder %s110, %s111
    %p120 = scmp.eq.s32.totalorder %s16, 0
    %p121 = por %p119, %p120
    %p122 = scmp.ne.s32.totalorder %s110, %s111
    %p123 = scmp.eq.s32.totalorder %s17, 1
    %p124 = por %p122, %p123
    %p126 = scmp.ne.s32.totalorder %s111, %s125
    %p127 = scmp.eq.s32.totalorder %s17, 0
    %p128 = por %p126, %p127
    %s129 = ssub.s32 %s11, %s18
    %p130 = scmp.eq.s32.totalorder %s129, 0
    %s132 = sadd.s32 %s131, 1
    %s133 = scalar_select %p130, %s131, %s132
    %p136 = pneg %p130
    %p137 = scmp.eq.s32.totalorder %s11, 1
    %p138 = por %p136, %p137
    %p139 = scmp.ne.s32.totalorder %s131, %s134
    %p140 = scmp.eq.s32.totalorder %s11, 0
    %p141 = por %p139, %p140
    %p142 = scmp.ne.s32.totalorder %s131, %s134
    %p143 = scmp.eq.s32.totalorder %s16, 1
    %p144 = por %p142, %p143
    %p145 = scmp.ne.s32.totalorder %s134, %s135
    %p146 = scmp.eq.s32.totalorder %s16, 0
    %p147 = por %p145, %p146
    %p148 = scmp.ne.s32.totalorder %s134, %s135
    %p149 = scmp.eq.s32.totalorder %s17, 1
    %p150 = por %p148, %p149
    %p152 = scmp.ne.s32.totalorder %s135, %s151
    %p153 = scmp.eq.s32.totalorder %s17, 0
    %p154 = por %p152, %p153
    %p155 = scmp.le.s32.totalorder 1, %s11
    %p156 = scmp.lt.s32.totalorder %s11, 3
    %p157 = pnand %p155, %p156
    %p158 = pneg %p157
    // Predicated region
    $region9: #{tpu_custom_call.1} parent=5 // pred_check
      _
    $region10: #{tpu_custom_call.1} parent=5 // pred_check_branch
      %160 = sbr.rel (%p157) target = $region12
    $region11: #{tpu_custom_call.1} parent=5 // pred_region
      %s161 = ssub.s32 %s11, 1
      // Predicated region
      $region13: #{tpu_custom_call.1} parent=11 // pred_check
        %p162 = pneg %p58
      $region14: #{tpu_custom_call.1} parent=11 // pred_check_branch
        %164 = sbr.rel (%p162) target = $region16
      $region15: #{tpu_custom_call.1} parent=11 // pred_region
        _
      $region16: #{tpu_custom_call.1} parent=11 // pred_fallthru
        _
      // Predicated region
      $region17: #{tpu_custom_call.1} parent=11 // pred_check
        %p165 = pneg %p79
      $region18: #{tpu_custom_call.1} parent=11 // pred_check_branch
        %167 = sbr.rel (%p165) target = $region20
      $region19: #{tpu_custom_call.1} parent=11 // pred_region
        _
      $region20: #{tpu_custom_call.1} parent=11 // pred_fallthru
        _
      // Predicated region
      $region21: #{tpu_custom_call.1} parent=11 // pred_check
        %p168 = pneg %p100
      $region22: #{tpu_custom_call.1} parent=11 // pred_check_branch
        %170 = sbr.rel (%p168) target = $region24
      $region23: #{tpu_custom_call.1} parent=11 // pred_region
        _
      $region24: #{tpu_custom_call.1} parent=11 // pred_fallthru
        _
      // Predicated region
      $region25: #{tpu_custom_call.1} parent=11 // pred_check
        %p171 = pneg %p121
      $region26: #{tpu_custom_call.1} parent=11 // pred_check_branch
        %173 = sbr.rel (%p171) target = $region28
      $region27: #{tpu_custom_call.1} parent=11 // pred_region
        _
      $region28: #{tpu_custom_call.1} parent=11 // pred_fallthru
        _
    $region12: #{tpu_custom_call.1} parent=5 // pred_fallthru
      _
    %p174 = scmp.lt.s32.totalorder %s11, 2
    // Predicated region
    $region29: #{tpu_custom_call.1} parent=5 // pred_check
      %p175 = pneg %p174
    $region30: #{tpu_custom_call.1} parent=5 // pred_check_branch
      %177 = sbr.rel (%p175) target = $region32
    $region31: #{tpu_custom_call.1} parent=5 // pred_region
      // Predicated region
      $region33: #{tpu_custom_call.1} parent=31 // pred_check
        %p178 = pneg %p31
      $region34: #{tpu_custom_call.1} parent=31 // pred_check_branch
        %180 = sbr.rel (%p178) target = $region36
      $region35: #{tpu_custom_call.1} parent=31 // pred_region
        %s181 = smul.u32 16, %s11
        %p182 = scmp.lt.s32.totalorder %s181, 31
        %s183 = scalar_select %p182, %s181, 31
        %s184 = smul.addr %s183, 8
        %s185 = scalar_lea.vmem %s0, %s184
        %s186 = smul.u32 16, %s11
      $region36: #{tpu_custom_call.1} parent=31 // pred_fallthru
        _
    $region32: #{tpu_custom_call.1} parent=5 // pred_fallthru
      _
    %p187 = scmp.le.s32.totalorder 1, %s11
    %p188 = scmp.lt.s32.totalorder %s11, 3
    %p189 = pnand %p187, %p188
    %p190 = pneg %p189
    // Predicated region
    $region37: #{tpu_custom_call.1} parent=5 // pred_check
      _
    $region38: #{tpu_custom_call.1} parent=5 // pred_check_branch
      %192 = sbr.rel (%p189) target = $region40
    $region39: #{tpu_custom_call.1} parent=5 // pred_region
      %s193 = ssub.s32 %s11, 1
      %s194 = smul.u32 16, %s16
      %p195 = scmp.lt.s32.totalorder %s194, 31
      %s196 = scalar_select %p195, %s194, 31
      %s197 = smul.addr %s196, 8
      %s198 = scalar_lea.vmem %s0, %s197
      %p199 = pneg %p37
      %p200 = pneg %p34
      %p201 = pneg %p58
      %p202 = pneg %p55
      %p203 = pneg %p79
      %p204 = pneg %p76
      %p205 = pneg %p100
      %p206 = pneg %p97
      %p207 = pneg %p121
      %p208 = pneg %p118
      %p209 = pneg %p147
      %p210 = pneg %p144
      %s211 = smul.u32 2, %s16
      %p212 = scmp.lt.s32.totalorder %s211, 3
      %s213 = scalar_select %p212, %s211, 3
      %s214 = smul.addr %s213, 4
      %s215 = smul.addr %s214, 8
      %s216 = scalar_lea.vmem %s5, %s215
      %s217 = smul.u32 16, %s16
      %p218 = scmp.lt.s32.totalorder %s217, 31
      %s219 = scalar_select %p218, %s217, 31
      %s220 = smul.addr %s219, 8
      %s221 = scalar_lea.vmem %s0, %s220
      %s222 = smul.u32 16, %s16
      %s223 = smul.u32 2, %s16
      %p224 = scmp.lt.s32.totalorder %s223, 3
      %s225 = scalar_select %p224, %s223, 3
      %s226 = smul.addr %s225, 4
      %s227 = smul.addr %s226, 8
      %s228 = scalar_lea.vmem %s5, %s227
      %s229 = smul.u32 2, %s16
      %v230 = vld [vmem:[%s221] sm:$0xff]
      %v231 = vld [vmem:[%s221 + $0x8] sm:$0xff]
      %v232 = vld [vmem:[%s221 + $0x10] sm:$0xff]
      %v233 = vld [vmem:[%s221 + $0x18] sm:$0xff]
      %v234 = vld [vmem:[%s221 + $0x20] sm:$0xff]
      %v235 = vld [vmem:[%s221 + $0x28] sm:$0xff]
      %v236 = vld [vmem:[%s221 + $0x30] sm:$0xff]
      %v237 = vld [vmem:[%s221 + $0x38] sm:$0xff]
      %v238 = vld [vmem:[%s221 + $0x40] sm:$0xff]
      %v239 = vld [vmem:[%s221 + $0x48] sm:$0xff]
      %v240 = vld [vmem:[%s221 + $0x50] sm:$0xff]
      %v241 = vld [vmem:[%s221 + $0x58] sm:$0xff]
      %v242 = vld [vmem:[%s221 + $0x60] sm:$0xff]
      %v243 = vld [vmem:[%s221 + $0x68] sm:$0xff]
      %v244 = vld [vmem:[%s221 + $0x70] sm:$0xff]
      %v245 = vld [vmem:[%s221 + $0x78] sm:$0xff]
      %vm246 = vcmask 31744
      %247 = vst.msk [vmem:[#allocation2] sm:$0xff] %vm246, 0.0
      %248 = vst.msk [vmem:[#allocation2 + $0x8] sm:$0xff] %vm246, %v230
      %249 = vst.msk [vmem:[#allocation2 + $0x10] sm:$0xff] %vm246, %v231
      %250 = vst.msk [vmem:[#allocation2 + $0x18] sm:$0xff] %vm246, %v232
      %251 = vst.msk [vmem:[#allocation2 + $0x20] sm:$0xff] %vm246, %v233
      %252 = vst.msk [vmem:[#allocation2 + $0x28] sm:$0xff] %vm246, %v234
      %253 = vst.msk [vmem:[#allocation2 + $0x30] sm:$0xff] %vm246, %v235
      %254 = vst.msk [vmem:[#allocation2 + $0x38] sm:$0xff] %vm246, %v236
      %255 = vst.msk [vmem:[#allocation2 + $0x40] sm:$0xff] %vm246, %v237
      %256 = vst.msk [vmem:[#allocation2 + $0x48] sm:$0xff] %vm246, %v238
      %257 = vst.msk [vmem:[#allocation2 + $0x50] sm:$0xff] %vm246, %v239
      %258 = vst.msk [vmem:[#allocation2 + $0x58] sm:$0xff] %vm246, %v240
      %259 = vst.msk [vmem:[#allocation2 + $0x60] sm:$0xff] %vm246, %v241
      %260 = vst.msk [vmem:[#allocation2 + $0x68] sm:$0xff] %vm246, %v242
      %261 = vst.msk [vmem:[#allocation2 + $0x70] sm:$0xff] %vm246, %v243
      %262 = vst.msk [vmem:[#allocation2 + $0x78] sm:$0xff] %vm246, %v244
      %263 = vst.msk [vmem:[#allocation2 + $0x80] sm:$0xff] %vm246, %v245
      %264 = vst.msk [vmem:[#allocation2 + $0x88] sm:$0xff] %vm246, 0.0
      %v265 = vlaneseq
      %v266 = vshrl.u32 %v265, 7
      %v267 = vadd.s32 %v266, 8
      %v268 = vadd.s32 %v266, 16
      %v269 = vadd.s32 %v266, 24
      %v270 = vadd.s32 %v266, 32
      %v271 = vadd.s32 %v266, 40
      %v272 = vadd.s32 %v266, 48
      %v273 = vadd.s32 %v266, 56
      %v274 = vadd.s32 %v266, 64
      %v275 = vadd.s32 %v266, 72
      %v276 = vadd.s32 %v266, 80
      %v277 = vadd.s32 %v266, 88
      %v278 = vadd.s32 %v266, 96
      %v279 = vadd.s32 %v266, 104
      %v280 = vadd.s32 %v266, 112
      %v281 = vadd.s32 %v266, 120
      %vm282 = vcmp.lt.s32.totalorder %v266, 0
      %v283 = vsub.s32 0, %v266
      %v284 = vsel %vm282, %v283, %v266
      %v285 = vshrl.u32 %v284, 6
      %v286 = vand.u32 %v284, 63
      %v287 = vsub.s32 0, %v286
      %v288 = vsel %vm282, %v287, %v286
      %vm289 = vcmp.lt.s32.totalorder %v267, 0
      %v290 = vsub.s32 0, %v267
      %v291 = vsel %vm289, %v290, %v267
      %v292 = vshrl.u32 %v291, 6
      %v293 = vand.u32 %v291, 63
      %v294 = vsub.s32 0, %v293
      %v295 = vsel %vm289, %v294, %v293
      %vm296 = vcmp.lt.s32.totalorder %v268, 0
      %v297 = vsub.s32 0, %v268
      %v298 = vsel %vm296, %v297, %v268
      %v299 = vshrl.u32 %v298, 6
      %v300 = vand.u32 %v298, 63
      %v301 = vsub.s32 0, %v300
      %v302 = vsel %vm296, %v301, %v300
      %vm303 = vcmp.lt.s32.totalorder %v269, 0
      %v304 = vsub.s32 0, %v269
      %v305 = vsel %vm303, %v304, %v269
      %v306 = vshrl.u32 %v305, 6
      %v307 = vand.u32 %v305, 63
      %v308 = vsub.s32 0, %v307
      %v309 = vsel %vm303, %v308, %v307
      %vm310 = vcmp.lt.s32.totalorder %v270, 0
      %v311 = vsub.s32 0, %v270
      %v312 = vsel %vm310, %v311, %v270
      %v313 = vshrl.u32 %v312, 6
      %v314 = vand.u32 %v312, 63
      %v315 = vsub.s32 0, %v314
      %v316 = vsel %vm310, %v315, %v314
      %vm317 = vcmp.lt.s32.totalorder %v271, 0
      %v318 = vsub.s32 0, %v271
      %v319 = vsel %vm317, %v318, %v271
      %v320 = vshrl.u32 %v319, 6
      %v321 = vand.u32 %v319, 63
      %v322 = vsub.s32 0, %v321
      %v323 = vsel %vm317, %v322, %v321
      %vm324 = vcmp.lt.s32.totalorder %v272, 0
      %v325 = vsub.s32 0, %v272
      %v326 = vsel %vm324, %v325, %v272
      %v327 = vshrl.u32 %v326, 6
      %v328 = vand.u32 %v326, 63
      %v329 = vsub.s32 0, %v328
      %v330 = vsel %vm324, %v329, %v328
      %vm331 = vcmp.lt.s32.totalorder %v273, 0
      %v332 = vsub.s32 0, %v273
      %v333 = vsel %vm331, %v332, %v273
      %v334 = vshrl.u32 %v333, 6
      %v335 = vand.u32 %v333, 63
      %v336 = vsub.s32 0, %v335
      %v337 = vsel %vm331, %v336, %v335
      %vm338 = vcmp.lt.s32.totalorder %v274, 0
      %v339 = vsub.s32 0, %v274
      %v340 = vsel %vm338, %v339, %v274
      %v341 = vshrl.u32 %v340, 6
      %v342 = vand.u32 %v340, 63
      %v343 = vsub.s32 0, %v342
      %v344 = vsel %vm338, %v343, %v342
      %vm345 = vcmp.lt.s32.totalorder %v275, 0
      %v346 = vsub.s32 0, %v275
      %v347 = vsel %vm345, %v346, %v275
      %v348 = vshrl.u32 %v347, 6
      %v349 = vand.u32 %v347, 63
      %v350 = vsub.s32 0, %v349
      %v351 = vsel %vm345, %v350, %v349
      %vm352 = vcmp.lt.s32.totalorder %v276, 0
      %v353 = vsub.s32 0, %v276
      %v354 = vsel %vm352, %v353, %v276
      %v355 = vshrl.u32 %v354, 6
      %v356 = vand.u32 %v354, 63
      %v357 = vsub.s32 0, %v356
      %v358 = vsel %vm352, %v357, %v356
      %vm359 = vcmp.lt.s32.totalorder %v277, 0
      %v360 = vsub.s32 0, %v277
      %v361 = vsel %vm359, %v360, %v277
      %v362 = vshrl.u32 %v361, 6
      %v363 = vand.u32 %v361, 63
      %v364 = vsub.s32 0, %v363
      %v365 = vsel %vm359, %v364, %v363
      %vm366 = vcmp.lt.s32.totalorder %v278, 0
      %v367 = vsub.s32 0, %v278
      %v368 = vsel %vm366, %v367, %v278
      %v369 = vshrl.u32 %v368, 6
      %v370 = vand.u32 %v368, 63
      %v371 = vsub.s32 0, %v370
      %v372 = vsel %vm366, %v371, %v370
      %vm373 = vcmp.lt.s32.totalorder %v279, 0
      %v374 = vsub.s32 0, %v279
      %v375 = vsel %vm373, %v374, %v279
      %v376 = vshrl.u32 %v375, 6
      %v377 = vand.u32 %v375, 63
      %v378 = vsub.s32 0, %v377
      %v379 = vsel %vm373, %v378, %v377
      %vm380 = vcmp.lt.s32.totalorder %v280, 0
      %v381 = vsub.s32 0, %v280
      %v382 = vsel %vm380, %v381, %v280
      %v383 = vshrl.u32 %v382, 6
      %v384 = vand.u32 %v382, 63
      %v385 = vsub.s32 0, %v384
      %v386 = vsel %vm380, %v385, %v384
      %vm387 = vcmp.lt.s32.totalorder %v281, 0
      %v388 = vsub.s32 0, %v281
      %v389 = vsel %vm387, %v388, %v281
      %v390 = vshrl.u32 %v389, 6
      %v391 = vand.u32 %v389, 63
      %v392 = vsub.s32 0, %v391
      %v393 = vsel %vm387, %v392, %v391
      %vm394 = vcmp.ne.s32.totalorder %v288, 0
      %vm395 = vcmp.ne.s32.totalorder %v295, 0
      %vm396 = vcmp.ne.s32.totalorder %v302, 0
      %vm397 = vcmp.ne.s32.totalorder %v309, 0
      %vm398 = vcmp.ne.s32.totalorder %v316, 0
      %vm399 = vcmp.ne.s32.totalorder %v323, 0
      %vm400 = vcmp.ne.s32.totalorder %v330, 0
      %vm401 = vcmp.ne.s32.totalorder %v337, 0
      %vm402 = vcmp.ne.s32.totalorder %v344, 0
      %vm403 = vcmp.ne.s32.totalorder %v351, 0
      %vm404 = vcmp.ne.s32.totalorder %v358, 0
      %vm405 = vcmp.ne.s32.totalorder %v365, 0
      %vm406 = vcmp.ne.s32.totalorder %v372, 0
      %vm407 = vcmp.ne.s32.totalorder %v379, 0
      %vm408 = vcmp.ne.s32.totalorder %v386, 0
      %vm409 = vcmp.ne.s32.totalorder %v393, 0
      %vm410 = vcmp.lt.s32.totalorder %v288, 0
      %vm411 = vcmp.lt.s32.totalorder %v295, 0
      %vm412 = vcmp.lt.s32.totalorder %v302, 0
      %vm413 = vcmp.lt.s32.totalorder %v309, 0
      %vm414 = vcmp.lt.s32.totalorder %v316, 0
      %vm415 = vcmp.lt.s32.totalorder %v323, 0
      %vm416 = vcmp.lt.s32.totalorder %v330, 0
      %vm417 = vcmp.lt.s32.totalorder %v337, 0
      %vm418 = vcmp.lt.s32.totalorder %v344, 0
      %vm419 = vcmp.lt.s32.totalorder %v351, 0
      %vm420 = vcmp.lt.s32.totalorder %v358, 0
      %vm421 = vcmp.lt.s32.totalorder %v365, 0
      %vm422 = vcmp.lt.s32.totalorder %v372, 0
      %vm423 = vcmp.lt.s32.totalorder %v379, 0
      %vm424 = vcmp.lt.s32.totalorder %v386, 0
      %vm425 = vcmp.lt.s32.totalorder %v393, 0
      %vm426 = vmand %vm410, %vm394
      %vm427 = vmand %vm411, %vm395
      %vm428 = vmand %vm412, %vm396
      %vm429 = vmand %vm413, %vm397
      %vm430 = vmand %vm414, %vm398
      %vm431 = vmand %vm415, %vm399
      %vm432 = vmand %vm416, %vm400
      %vm433 = vmand %vm417, %vm401
      %vm434 = vmand %vm418, %vm402
      %vm435 = vmand %vm419, %vm403
      %vm436 = vmand %vm420, %vm404
      %vm437 = vmand %vm421, %vm405
      %vm438 = vmand %vm422, %vm406
      %vm439 = vmand %vm423, %vm407
      %vm440 = vmand %vm424, %vm408
      %vm441 = vmand %vm425, %vm409
      %v442 = vadd.s32 %v288, 64
      %v443 = vadd.s32 %v295, 64
      %v444 = vadd.s32 %v302, 64
      %v445 = vadd.s32 %v309, 64
      %v446 = vadd.s32 %v316, 64
      %v447 = vadd.s32 %v323, 64
      %v448 = vadd.s32 %v330, 64
      %v449 = vadd.s32 %v337, 64
      %v450 = vadd.s32 %v344, 64
      %v451 = vadd.s32 %v351, 64
      %v452 = vadd.s32 %v358, 64
      %v453 = vadd.s32 %v365, 64
      %v454 = vadd.s32 %v372, 64
      %v455 = vadd.s32 %v379, 64
      %v456 = vadd.s32 %v386, 64
      %v457 = vadd.s32 %v393, 64
      %v458 = vsel %vm426, %v442, %v288
      %v459 = vsel %vm427, %v443, %v295
      %v460 = vsel %vm428, %v444, %v302
      %v461 = vsel %vm429, %v445, %v309
      %v462 = vsel %vm430, %v446, %v316
      %v463 = vsel %vm431, %v447, %v323
      %v464 = vsel %vm432, %v448, %v330
      %v465 = vsel %vm433, %v449, %v337
      %v466 = vsel %vm434, %v450, %v344
      %v467 = vsel %vm435, %v451, %v351
      %v468 = vsel %vm436, %v452, %v358
      %v469 = vsel %vm437, %v453, %v365
      %v470 = vsel %vm438, %v454, %v372
      %v471 = vsel %vm439, %v455, %v379
      %v472 = vsel %vm440, %v456, %v386
      %v473 = vsel %vm441, %v457, %v393
      %vm474 = vcmp.ne.s32.totalorder %v458, 0
      %vm475 = vcmp.ne.s32.totalorder %v459, 0
      %vm476 = vcmp.ne.s32.totalorder %v460, 0
      %vm477 = vcmp.ne.s32.totalorder %v461, 0
      %vm478 = vcmp.ne.s32.totalorder %v462, 0
      %vm479 = vcmp.ne.s32.totalorder %v463, 0
      %vm480 = vcmp.ne.s32.totalorder %v464, 0
      %vm481 = vcmp.ne.s32.totalorder %v465, 0
      %vm482 = vcmp.ne.s32.totalorder %v466, 0
      %vm483 = vcmp.ne.s32.totalorder %v467, 0
      %vm484 = vcmp.ne.s32.totalorder %v468, 0
      %vm485 = vcmp.ne.s32.totalorder %v469, 0
      %vm486 = vcmp.ne.s32.totalorder %v470, 0
      %vm487 = vcmp.ne.s32.totalorder %v471, 0
      %vm488 = vcmp.ne.s32.totalorder %v472, 0
      %vm489 = vcmp.ne.s32.totalorder %v473, 0
      %v490 = vld [vmem:[#allocation2 + $0x7] sm:$0xff]
      %v491 = vld [vmem:[#allocation2 + $0xf] sm:$0xff]
      %v492 = vld [vmem:[#allocation2 + $0x17] sm:$0xff]
      %v493 = vld [vmem:[#allocation2 + $0x1f] sm:$0xff]
      %v494 = vld [vmem:[#allocation2 + $0x27] sm:$0xff]
      %v495 = vld [vmem:[#allocation2 + $0x2f] sm:$0xff]
      %v496 = vld [vmem:[#allocation2 + $0x37] sm:$0xff]
      %v497 = vld [vmem:[#allocation2 + $0x3f] sm:$0xff]
      %v498 = vld [vmem:[#allocation2 + $0x47] sm:$0xff]
      %v499 = vld [vmem:[#allocation2 + $0x4f] sm:$0xff]
      %v500 = vld [vmem:[#allocation2 + $0x57] sm:$0xff]
      %v501 = vld [vmem:[#allocation2 + $0x5f] sm:$0xff]
      %v502 = vld [vmem:[#allocation2 + $0x67] sm:$0xff]
      %v503 = vld [vmem:[#allocation2 + $0x6f] sm:$0xff]
      %v504 = vld [vmem:[#allocation2 + $0x77] sm:$0xff]
      %v505 = vld [vmem:[#allocation2 + $0x7f] sm:$0xff]
      %v506 = vsel %vm474, %v490, 0.0
      %v507 = vsel %vm475, %v491, 0.0
      %v508 = vsel %vm476, %v492, 0.0
      %v509 = vsel %vm477, %v493, 0.0
      %v510 = vsel %vm478, %v494, 0.0
      %v511 = vsel %vm479, %v495, 0.0
      %v512 = vsel %vm480, %v496, 0.0
      %v513 = vsel %vm481, %v497, 0.0
      %v514 = vsel %vm482, %v498, 0.0
      %v515 = vsel %vm483, %v499, 0.0
      %v516 = vsel %vm484, %v500, 0.0
      %v517 = vsel %vm485, %v501, 0.0
      %v518 = vsel %vm486, %v502, 0.0
      %v519 = vsel %vm487, %v503, 0.0
      %v520 = vsel %vm488, %v504, 0.0
      %v521 = vsel %vm489, %v505, 0.0
      %vm522 = vcmp.ne.s32.totalorder %v458, 63
      %vm523 = vcmp.ne.s32.totalorder %v459, 63
      %vm524 = vcmp.ne.s32.totalorder %v460, 63
      %vm525 = vcmp.ne.s32.totalorder %v461, 63
      %vm526 = vcmp.ne.s32.totalorder %v462, 63
      %vm527 = vcmp.ne.s32.totalorder %v463, 63
      %vm528 = vcmp.ne.s32.totalorder %v464, 63
      %vm529 = vcmp.ne.s32.totalorder %v465, 63
      %vm530 = vcmp.ne.s32.totalorder %v466, 63
      %vm531 = vcmp.ne.s32.totalorder %v467, 63
      %vm532 = vcmp.ne.s32.totalorder %v468, 63
      %vm533 = vcmp.ne.s32.totalorder %v469, 63
      %vm534 = vcmp.ne.s32.totalorder %v470, 63
      %vm535 = vcmp.ne.s32.totalorder %v471, 63
      %vm536 = vcmp.ne.s32.totalorder %v472, 63
      %vm537 = vcmp.ne.s32.totalorder %v473, 63
      %v538 = vld [vmem:[#allocation2 + $0x9] sm:$0xff]
      %v539 = vld [vmem:[#allocation2 + $0x11] sm:$0xff]
      %v540 = vld [vmem:[#allocation2 + $0x19] sm:$0xff]
      %v541 = vld [vmem:[#allocation2 + $0x21] sm:$0xff]
      %v542 = vld [vmem:[#allocation2 + $0x29] sm:$0xff]
      %v543 = vld [vmem:[#allocation2 + $0x31] sm:$0xff]
      %v544 = vld [vmem:[#allocation2 + $0x39] sm:$0xff]
      %v545 = vld [vmem:[#allocation2 + $0x41] sm:$0xff]
      %v546 = vld [vmem:[#allocation2 + $0x49] sm:$0xff]
      %v547 = vld [vmem:[#allocation2 + $0x51] sm:$0xff]
      %v548 = vld [vmem:[#allocation2 + $0x59] sm:$0xff]
      %v549 = vld [vmem:[#allocation2 + $0x61] sm:$0xff]
      %v550 = vld [vmem:[#allocation2 + $0x69] sm:$0xff]
      %v551 = vld [vmem:[#allocation2 + $0x71] sm:$0xff]
      %v552 = vld [vmem:[#allocation2 + $0x79] sm:$0xff]
      %v553 = vld [vmem:[#allocation2 + $0x81] sm:$0xff]
      %v554 = vsel %vm522, %v538, 0.0
      %v555 = vsel %vm523, %v539, 0.0
      %v556 = vsel %vm524, %v540, 0.0
      %v557 = vsel %vm525, %v541, 0.0
      %v558 = vsel %vm526, %v542, 0.0
      %v559 = vsel %vm527, %v543, 0.0
      %v560 = vsel %vm528, %v544, 0.0
      %v561 = vsel %vm529, %v545, 0.0
      %v562 = vsel %vm530, %v546, 0.0
      %v563 = vsel %vm531, %v547, 0.0
      %v564 = vsel %vm532, %v548, 0.0
      %v565 = vsel %vm533, %v549, 0.0
      %v566 = vsel %vm534, %v550, 0.0
      %v567 = vsel %vm535, %v551, 0.0
      %v568 = vsel %vm536, %v552, 0.0
      %v569 = vsel %vm537, %v553, 0.0
      %586 = vrot.lane.b32.xlu0 %v230, 4
      %v587 = vpop.permute.xlu0 %586
      %588 = vrot.lane.b32.xlu0 %v231, 4
      %v589 = vpop.permute.xlu0 %588
      %590 = vrot.lane.b32.xlu0 %v232, 4
      %v591 = vpop.permute.xlu0 %590
      %592 = vrot.lane.b32.xlu0 %v233, 4
      %v593 = vpop.permute.xlu0 %592
      %594 = vrot.lane.b32.xlu0 %v234, 4
      %v595 = vpop.permute.xlu0 %594
      %596 = vrot.lane.b32.xlu0 %v235, 4
      %v597 = vpop.permute.xlu0 %596
      %598 = vrot.lane.b32.xlu0 %v236, 4
      %v599 = vpop.permute.xlu0 %598
      %600 = vrot.lane.b32.xlu0 %v237, 4
      %v601 = vpop.permute.xlu0 %600
      %602 = vrot.lane.b32.xlu0 %v238, 4
      %v603 = vpop.permute.xlu0 %602
      %604 = vrot.lane.b32.xlu0 %v239, 4
      %v605 = vpop.permute.xlu0 %604
      %606 = vrot.lane.b32.xlu0 %v240, 4
      %v607 = vpop.permute.xlu0 %606
      %608 = vrot.lane.b32.xlu0 %v241, 4
      %v609 = vpop.permute.xlu0 %608
      %610 = vrot.lane.b32.xlu0 %v242, 4
      %v611 = vpop.permute.xlu0 %610
      %612 = vrot.lane.b32.xlu0 %v243, 4
      %v613 = vpop.permute.xlu0 %612
      %614 = vrot.lane.b32.xlu0 %v244, 4
      %v615 = vpop.permute.xlu0 %614
      %616 = vrot.lane.b32.xlu0 %v245, 4
      %v617 = vpop.permute.xlu0 %616
      %650 = vrot.lane.b32.xlu0 %v554, 8
      %v651 = vpop.permute.xlu0 %650
      %652 = vrot.lane.b32.xlu0 %v555, 8
      %v653 = vpop.permute.xlu0 %652
      %654 = vrot.lane.b32.xlu0 %v556, 8
      %v655 = vpop.permute.xlu0 %654
      %656 = vrot.lane.b32.xlu0 %v557, 8
      %v657 = vpop.permute.xlu0 %656
      %658 = vrot.lane.b32.xlu0 %v558, 8
      %v659 = vpop.permute.xlu0 %658
      %660 = vrot.lane.b32.xlu0 %v559, 8
      %v661 = vpop.permute.xlu0 %660
      %662 = vrot.lane.b32.xlu0 %v560, 8
      %v663 = vpop.permute.xlu0 %662
      %664 = vrot.lane.b32.xlu0 %v561, 8
      %v665 = vpop.permute.xlu0 %664
      %666 = vrot.lane.b32.xlu0 %v562, 8
      %v667 = vpop.permute.xlu0 %666
      %668 = vrot.lane.b32.xlu0 %v563, 8
      %v669 = vpop.permute.xlu0 %668
      %670 = vrot.lane.b32.xlu0 %v564, 8
      %v671 = vpop.permute.xlu0 %670
      %672 = vrot.lane.b32.xlu0 %v565, 8
      %v673 = vpop.permute.xlu0 %672
      %674 = vrot.lane.b32.xlu0 %v566, 8
      %v675 = vpop.permute.xlu0 %674
      %676 = vrot.lane.b32.xlu0 %v567, 8
      %v677 = vpop.permute.xlu0 %676
      %678 = vrot.lane.b32.xlu0 %v568, 8
      %v679 = vpop.permute.xlu0 %678
      %680 = vrot.lane.b32.xlu0 %v569, 8
      %v681 = vpop.permute.xlu0 %680
      %v698 = vsel %vm246, %v506, %v587
      %v699 = vsel %vm246, %v507, %v589
      %v700 = vsel %vm246, %v508, %v591
      %v701 = vsel %vm246, %v509, %v593
      %v702 = vsel %vm246, %v510, %v595
      %v703 = vsel %vm246, %v511, %v597
      %v704 = vsel %vm246, %v512, %v599
      %v705 = vsel %vm246, %v513, %v601
      %v706 = vsel %vm246, %v514, %v603
      %v707 = vsel %vm246, %v515, %v605
      %v708 = vsel %vm246, %v516, %v607
      %v709 = vsel %vm246, %v517, %v609
      %v710 = vsel %vm246, %v518, %v611
      %v711 = vsel %vm246, %v519, %v613
      %v712 = vsel %vm246, %v520, %v615
      %v713 = vsel %vm246, %v521, %v617
      %vm714 = vcmask 64512
      %v715 = vsel %vm714, %v698, %v651
      %v716 = vsel %vm714, %v699, %v653
      %v717 = vsel %vm714, %v700, %v655
      %v718 = vsel %vm714, %v701, %v657
      %v719 = vsel %vm714, %v702, %v659
      %v720 = vsel %vm714, %v703, %v661
      %v721 = vsel %vm714, %v704, %v663
      %v722 = vsel %vm714, %v705, %v665
      %v723 = vsel %vm714, %v706, %v667
      %v724 = vsel %vm714, %v707, %v669
      %v725 = vsel %vm714, %v708, %v671
      %v726 = vsel %vm714, %v709, %v673
      %v727 = vsel %vm714, %v710, %v675
      %v728 = vsel %vm714, %v711, %v677
      %v729 = vsel %vm714, %v712, %v679
      %v730 = vsel %vm714, %v713, %v681
      %v731 = vld [vmem:[%s1] sm:$0xff]
      %v732 = vld [vmem:[%s1 + $0x8] sm:$0xf]
      %v733 = vld [vmem:[%s2] sm:$0x1]
      %v735 = vperm.slane %v733, 0
      %vm737 = vcmask 97280
      %v739 = vsel %vm737, %v715, 0
      %v742 = vsel %vm737, %v716, 0
      %v745 = vsel %vm737, %v717, 0
      %v748 = vsel %vm737, %v718, 0
      %v751 = vsel %vm737, %v719, 0
      %v754 = vsel %vm737, %v720, 0
      %v757 = vsel %vm737, %v721, 0
      %v760 = vsel %vm737, %v722, 0
      %v763 = vsel %vm737, %v723, 0
      %v766 = vsel %vm737, %v724, 0
      %v769 = vsel %vm737, %v725, 0
      %v772 = vsel %vm737, %v726, 0
      %v775 = vsel %vm737, %v727, 0
      %v778 = vsel %vm737, %v728, 0
      %v781 = vsel %vm737, %v729, 0
      %v784 = vsel %vm737, %v730, 0
      %vm786 = vcmask 1043456
      %v788 = vsel %vm786, %v732, 0
      %790 = vmatpush.msra.mxu0 0.0
      %791 = vmatpush.msra.mxu0 0.0
      %792 = vmatpush.msra.mxu0 0.0
      %793 = vmatpush.msra.mxu0 0.0
      %794 = vmatpush.msra.mxu0 0.0
      %795 = vmatpush.msra.mxu0 0.0
      %796 = vmatpush.msra.mxu0 0.0
      %797 = vmatpush.msra.mxu0 0.0
      %798 = vmatpush.msra.mxu0 0.0
      %799 = vmatpush.msra.mxu0 0.0
      %800 = vmatpush.msra.mxu0 0.0
      %801 = vmatpush.msra.mxu0 0.0
      %802 = vmatpush.msra.mxu0 0.0
      %803 = vmatpush.msra.mxu0 0.0
      %804 = vmatpush.msra.mxu0 %v788
      %805 = vmatpush.msra.mxu0 %v731
      %806 = vmatmul.f32.gmra.mxu0 %v739
      %v807 = vpop.f32.mrf.mxu0
      %v808 = vadd.f32 %v735, %v807
      %809 = vmatmul.f32.gmra.mxu0 %v742
      %v810 = vpop.f32.mrf.mxu0
      %v811 = vadd.f32 %v735, %v810
      %812 = vmatmul.f32.gmra.mxu0 %v745
      %v813 = vpop.f32.mrf.mxu0
      %v814 = vadd.f32 %v735, %v813
      %815 = vmatmul.f32.gmra.mxu0 %v748
      %v816 = vpop.f32.mrf.mxu0
      %v817 = vadd.f32 %v735, %v816
      %818 = vmatmul.f32.gmra.mxu0 %v751
      %v819 = vpop.f32.mrf.mxu0
      %v820 = vadd.f32 %v735, %v819
      %821 = vmatmul.f32.gmra.mxu0 %v754
      %v822 = vpop.f32.mrf.mxu0
      %v823 = vadd.f32 %v735, %v822
      %824 = vmatmul.f32.gmra.mxu0 %v757
      %v825 = vpop.f32.mrf.mxu0
      %v826 = vadd.f32 %v735, %v825
      %827 = vmatmul.f32.gmra.mxu0 %v760
      %v828 = vpop.f32.mrf.mxu0
      %v829 = vadd.f32 %v735, %v828
      %830 = vmatmul.f32.gmra.mxu0 %v763
      %v831 = vpop.f32.mrf.mxu0
      %v832 = vadd.f32 %v735, %v831
      %833 = vmatmul.f32.gmra.mxu0 %v766
      %v834 = vpop.f32.mrf.mxu0
      %v835 = vadd.f32 %v735, %v834
      %836 = vmatmul.f32.gmra.mxu0 %v769
      %v837 = vpop.f32.mrf.mxu0
      %v838 = vadd.f32 %v735, %v837
      %839 = vmatmul.f32.gmra.mxu0 %v772
      %v840 = vpop.f32.mrf.mxu0
      %v841 = vadd.f32 %v735, %v840
      %842 = vmatmul.f32.gmra.mxu0 %v775
      %v843 = vpop.f32.mrf.mxu0
      %v844 = vadd.f32 %v735, %v843
      %845 = vmatmul.f32.gmra.mxu0 %v778
      %v846 = vpop.f32.mrf.mxu0
      %v847 = vadd.f32 %v735, %v846
      %848 = vmatmul.f32.gmra.mxu0 %v781
      %v849 = vpop.f32.mrf.mxu0
      %v850 = vadd.f32 %v735, %v849
      %851 = vmatmul.f32.gmra.mxu0 %v784
      %v852 = vpop.f32.mrf.mxu0
      %v853 = vadd.f32 %v735, %v852
      %854 = vdwg.mxu0
      %v855 = vmax.f32 %v808, 0.0
      %v856 = vmax.f32 %v811, 0.0
      %v857 = vmax.f32 %v814, 0.0
      %v858 = vmax.f32 %v817, 0.0
      %v859 = vmax.f32 %v820, 0.0
      %v860 = vmax.f32 %v823, 0.0
      %v861 = vmax.f32 %v826, 0.0
      %v862 = vmax.f32 %v829, 0.0
      %v863 = vmax.f32 %v832, 0.0
      %v864 = vmax.f32 %v835, 0.0
      %v865 = vmax.f32 %v838, 0.0
      %v866 = vmax.f32 %v841, 0.0
      %v867 = vmax.f32 %v844, 0.0
      %v868 = vmax.f32 %v847, 0.0
      %v869 = vmax.f32 %v850, 0.0
      %v870 = vmax.f32 %v853, 0.0
      %vm871 = vcmask 130048
      %872 = vst.msk [vmem:[#allocation3] sm:$0xff] %vm871, %v855
      %873 = vst.msk [vmem:[#allocation3 + $0x8] sm:$0xff] %vm871, %v856
      %874 = vst.msk [vmem:[#allocation3 + $0x10] sm:$0xff] %vm871, %v857
      %875 = vst.msk [vmem:[#allocation3 + $0x18] sm:$0xff] %vm871, %v858
      %876 = vst.msk [vmem:[#allocation3 + $0x20] sm:$0xff] %vm871, %v859
      %877 = vst.msk [vmem:[#allocation3 + $0x28] sm:$0xff] %vm871, %v860
      %878 = vst.msk [vmem:[#allocation3 + $0x30] sm:$0xff] %vm871, %v861
      %879 = vst.msk [vmem:[#allocation3 + $0x38] sm:$0xff] %vm871, %v862
      %880 = vst.msk [vmem:[#allocation3 + $0x40] sm:$0xff] %vm871, %v863
      %881 = vst.msk [vmem:[#allocation3 + $0x48] sm:$0xff] %vm871, %v864
      %882 = vst.msk [vmem:[#allocation3 + $0x50] sm:$0xff] %vm871, %v865
      %883 = vst.msk [vmem:[#allocation3 + $0x58] sm:$0xff] %vm871, %v866
      %884 = vst.msk [vmem:[#allocation3 + $0x60] sm:$0xff] %vm871, %v867
      %885 = vst.msk [vmem:[#allocation3 + $0x68] sm:$0xff] %vm871, %v868
      %886 = vst.msk [vmem:[#allocation3 + $0x70] sm:$0xff] %vm871, %v869
      %887 = vst.msk [vmem:[#allocation3 + $0x78] sm:$0xff] %vm871, %v870
      %v888 = vld [vmem:[#allocation3] ss:$2 sm:$0xff]
      %s889 = scalar_lea.vmem [#allocation3], 16
      %v890 = vld [vmem:[%s889] ss:$2 sm:$0xff]
      %s891 = scalar_lea.vmem [#allocation3], 32
      %v892 = vld [vmem:[%s891] ss:$2 sm:$0xff]
      %s893 = scalar_lea.vmem [#allocation3], 48
      %v894 = vld [vmem:[%s893] ss:$2 sm:$0xff]
      %s895 = scalar_lea.vmem [#allocation3], 64
      %v896 = vld [vmem:[%s895] ss:$2 sm:$0xff]
      %s897 = scalar_lea.vmem [#allocation3], 80
      %v898 = vld [vmem:[%s897] ss:$2 sm:$0xff]
      %s899 = scalar_lea.vmem [#allocation3], 96
      %v900 = vld [vmem:[%s899] ss:$2 sm:$0xff]
      %s901 = scalar_lea.vmem [#allocation3], 112
      %v902 = vld [vmem:[%s901] ss:$2 sm:$0xff]
      %s903 = scalar_lea.vmem [#allocation3], 1
      %v904 = vld [vmem:[%s903] ss:$2 sm:$0xff]
      %s905 = scalar_lea.vmem [#allocation3], 17
      %v906 = vld [vmem:[%s905] ss:$2 sm:$0xff]
      %s907 = scalar_lea.vmem [#allocation3], 33
      %v908 = vld [vmem:[%s907] ss:$2 sm:$0xff]
      %s909 = scalar_lea.vmem [#allocation3], 49
      %v910 = vld [vmem:[%s909] ss:$2 sm:$0xff]
      %s911 = scalar_lea.vmem [#allocation3], 65
      %v912 = vld [vmem:[%s911] ss:$2 sm:$0xff]
      %s913 = scalar_lea.vmem [#allocation3], 81
      %v914 = vld [vmem:[%s913] ss:$2 sm:$0xff]
      %s915 = scalar_lea.vmem [#allocation3], 97
      %v916 = vld [vmem:[%s915] ss:$2 sm:$0xff]
      %s917 = scalar_lea.vmem [#allocation3], 113
      %v918 = vld [vmem:[%s917] ss:$2 sm:$0xff]
      %v919 = vmax.f32 %v888, %v904
      %v920 = vmax.f32 %v890, %v906
      %v921 = vmax.f32 %v892, %v908
      %v922 = vmax.f32 %v894, %v910
      %v923 = vmax.f32 %v896, %v912
      %v924 = vmax.f32 %v898, %v914
      %v925 = vmax.f32 %v900, %v916
      %v926 = vmax.f32 %v902, %v918
      %927 = vst.msk [vmem:[#allocation4] sm:$0xff] %vm871, 0.0
      %928 = vst.msk [vmem:[#allocation4 + $0x8] sm:$0xff] %vm871, %v919
      %929 = vst.msk [vmem:[#allocation4 + $0x10] sm:$0xff] %vm871, %v920
      %930 = vst.msk [vmem:[#allocation4 + $0x18] sm:$0xff] %vm871, %v921
      %931 = vst.msk [vmem:[#allocation4 + $0x20] sm:$0xff] %vm871, %v922
      %932 = vst.msk [vmem:[#allocation4 + $0x28] sm:$0xff] %vm871, %v923
      %933 = vst.msk [vmem:[#allocation4 + $0x30] sm:$0xff] %vm871, %v924
      %934 = vst.msk [vmem:[#allocation4 + $0x38] sm:$0xff] %vm871, %v925
      %935 = vst.msk [vmem:[#allocation4 + $0x40] sm:$0xff] %vm871, %v926
      %936 = vst.msk [vmem:[#allocation4 + $0x48] sm:$0xff] %vm871, 0.0
      %vm937 = vcmp.lt.s32.totalorder %v266, 0
      %v938 = vsub.s32 0, %v266
      %v939 = vsel %vm937, %v938, %v266
      %v940 = vshrl.u32 %v939, 5
      %v941 = vand.u32 %v939, 31
      %v942 = vsub.s32 0, %v941
      %v943 = vsel %vm937, %v942, %v941
      %vm944 = vcmp.lt.s32.totalorder %v267, 0
      %v945 = vsub.s32 0, %v267
      %v946 = vsel %vm944, %v945, %v267
      %v947 = vshrl.u32 %v946, 5
      %v948 = vand.u32 %v946, 31
      %v949 = vsub.s32 0, %v948
      %v950 = vsel %vm944, %v949, %v948
      %vm951 = vcmp.lt.s32.totalorder %v268, 0
      %v952 = vsub.s32 0, %v268
      %v953 = vsel %vm951, %v952, %v268
      %v954 = vshrl.u32 %v953, 5
      %v955 = vand.u32 %v953, 31
      %v956 = vsub.s32 0, %v955
      %v957 = vsel %vm951, %v956, %v955
      %vm958 = vcmp.lt.s32.totalorder %v269, 0
      %v959 = vsub.s32 0, %v269
      %v960 = vsel %vm958, %v959, %v269
      %v961 = vshrl.u32 %v960, 5
      %v962 = vand.u32 %v960, 31
      %v963 = vsub.s32 0, %v962
      %v964 = vsel %vm958, %v963, %v962
      %vm965 = vcmp.lt.s32.totalorder %v270, 0
      %v966 = vsub.s32 0, %v270
      %v967 = vsel %vm965, %v966, %v270
      %v968 = vshrl.u32 %v967, 5
      %v969 = vand.u32 %v967, 31
      %v970 = vsub.s32 0, %v969
      %v971 = vsel %vm965, %v970, %v969
      %vm972 = vcmp.lt.s32.totalorder %v271, 0
      %v973 = vsub.s32 0, %v271
      %v974 = vsel %vm972, %v973, %v271
      %v975 = vshrl.u32 %v974, 5
      %v976 = vand.u32 %v974, 31
      %v977 = vsub.s32 0, %v976
      %v978 = vsel %vm972, %v977, %v976
      %vm979 = vcmp.lt.s32.totalorder %v272, 0
      %v980 = vsub.s32 0, %v272
      %v981 = vsel %vm979, %v980, %v272
      %v982 = vshrl.u32 %v981, 5
      %v983 = vand.u32 %v981, 31
      %v984 = vsub.s32 0, %v983
      %v985 = vsel %vm979, %v984, %v983
      %vm986 = vcmp.lt.s32.totalorder %v273, 0
      %v987 = vsub.s32 0, %v273
      %v988 = vsel %vm986, %v987, %v273
      %v989 = vshrl.u32 %v988, 5
      %v990 = vand.u32 %v988, 31
      %v991 = vsub.s32 0, %v990
      %v992 = vsel %vm986, %v991, %v990
      %vm993 = vcmp.ne.s32.totalorder %v943, 0
      %vm994 = vcmp.ne.s32.totalorder %v950, 0
      %vm995 = vcmp.ne.s32.totalorder %v957, 0
      %vm996 = vcmp.ne.s32.totalorder %v964, 0
      %vm997 = vcmp.ne.s32.totalorder %v971, 0
      %vm998 = vcmp.ne.s32.totalorder %v978, 0
      %vm999 = vcmp.ne.s32.totalorder %v985, 0
      %vm1000 = vcmp.ne.s32.totalorder %v992, 0
      %vm1001 = vcmp.lt.s32.totalorder %v943, 0
      %vm1002 = vcmp.lt.s32.totalorder %v950, 0
      %vm1003 = vcmp.lt.s32.totalorder %v957, 0
      %vm1004 = vcmp.lt.s32.totalorder %v964, 0
      %vm1005 = vcmp.lt.s32.totalorder %v971, 0
      %vm1006 = vcmp.lt.s32.totalorder %v978, 0
      %vm1007 = vcmp.lt.s32.totalorder %v985, 0
      %vm1008 = vcmp.lt.s32.totalorder %v992, 0
      %vm1009 = vmand %vm1001, %vm993
      %vm1010 = vmand %vm1002, %vm994
      %vm1011 = vmand %vm1003, %vm995
      %vm1012 = vmand %vm1004, %vm996
      %vm1013 = vmand %vm1005, %vm997
      %vm1014 = vmand %vm1006, %vm998
      %vm1015 = vmand %vm1007, %vm999
      %vm1016 = vmand %vm1008, %vm1000
      %v1017 = vadd.s32 %v943, 32
      %v1018 = vadd.s32 %v950, 32
      %v1019 = vadd.s32 %v957, 32
      %v1020 = vadd.s32 %v964, 32
      %v1021 = vadd.s32 %v971, 32
      %v1022 = vadd.s32 %v978, 32
      %v1023 = vadd.s32 %v985, 32
      %v1024 = vadd.s32 %v992, 32
      %v1025 = vsel %vm1009, %v1017, %v943
      %v1026 = vsel %vm1010, %v1018, %v950
      %v1027 = vsel %vm1011, %v1019, %v957
      %v1028 = vsel %vm1012, %v1020, %v964
      %v1029 = vsel %vm1013, %v1021, %v971
      %v1030 = vsel %vm1014, %v1022, %v978
      %v1031 = vsel %vm1015, %v1023, %v985
      %v1032 = vsel %vm1016, %v1024, %v992
      %vm1033 = vcmp.ne.s32.totalorder %v1025, 0
      %vm1034 = vcmp.ne.s32.totalorder %v1026, 0
      %vm1035 = vcmp.ne.s32.totalorder %v1027, 0
      %vm1036 = vcmp.ne.s32.totalorder %v1028, 0
      %vm1037 = vcmp.ne.s32.totalorder %v1029, 0
      %vm1038 = vcmp.ne.s32.totalorder %v1030, 0
      %vm1039 = vcmp.ne.s32.totalorder %v1031, 0
      %vm1040 = vcmp.ne.s32.totalorder %v1032, 0
      %v1041 = vld [vmem:[#allocation4 + $0x7] sm:$0xff]
      %v1042 = vld [vmem:[#allocation4 + $0xf] sm:$0xff]
      %v1043 = vld [vmem:[#allocation4 + $0x17] sm:$0xff]
      %v1044 = vld [vmem:[#allocation4 + $0x1f] sm:$0xff]
      %v1045 = vld [vmem:[#allocation4 + $0x27] sm:$0xff]
      %v1046 = vld [vmem:[#allocation4 + $0x2f] sm:$0xff]
      %v1047 = vld [vmem:[#allocation4 + $0x37] sm:$0xff]
      %v1048 = vld [vmem:[#allocation4 + $0x3f] sm:$0xff]
      %v1049 = vsel %vm1033, %v1041, 0.0
      %v1050 = vsel %vm1034, %v1042, 0.0
      %v1051 = vsel %vm1035, %v1043, 0.0
      %v1052 = vsel %vm1036, %v1044, 0.0
      %v1053 = vsel %vm1037, %v1045, 0.0
      %v1054 = vsel %vm1038, %v1046, 0.0
      %v1055 = vsel %vm1039, %v1047, 0.0
      %v1056 = vsel %vm1040, %v1048, 0.0
      %vm1057 = vcmp.ne.s32.totalorder %v1025, 31
      %vm1058 = vcmp.ne.s32.totalorder %v1026, 31
      %vm1059 = vcmp.ne.s32.totalorder %v1027, 31
      %vm1060 = vcmp.ne.s32.totalorder %v1028, 31
      %vm1061 = vcmp.ne.s32.totalorder %v1029, 31
      %vm1062 = vcmp.ne.s32.totalorder %v1030, 31
      %vm1063 = vcmp.ne.s32.totalorder %v1031, 31
      %vm1064 = vcmp.ne.s32.totalorder %v1032, 31
      %v1065 = vld [vmem:[#allocation4 + $0x9] sm:$0xff]
      %v1066 = vld [vmem:[#allocation4 + $0x11] sm:$0xff]
      %v1067 = vld [vmem:[#allocation4 + $0x19] sm:$0xff]
      %v1068 = vld [vmem:[#allocation4 + $0x21] sm:$0xff]
      %v1069 = vld [vmem:[#allocation4 + $0x29] sm:$0xff]
      %v1070 = vld [vmem:[#allocation4 + $0x31] sm:$0xff]
      %v1071 = vld [vmem:[#allocation4 + $0x39] sm:$0xff]
      %v1072 = vld [vmem:[#allocation4 + $0x41] sm:$0xff]
      %v1073 = vsel %vm1057, %v1065, 0.0
      %v1074 = vsel %vm1058, %v1066, 0.0
      %v1075 = vsel %vm1059, %v1067, 0.0
      %v1076 = vsel %vm1060, %v1068, 0.0
      %v1077 = vsel %vm1061, %v1069, 0.0
      %v1078 = vsel %vm1062, %v1070, 0.0
      %v1079 = vsel %vm1063, %v1071, 0.0
      %v1080 = vsel %vm1064, %v1072, 0.0
      %1089 = vrot.lane.b32.xlu0 %v919, 16
      %v1090 = vpop.permute.xlu0 %1089
      %1091 = vrot.lane.b32.xlu0 %v920, 16
      %v1092 = vpop.permute.xlu0 %1091
      %1093 = vrot.lane.b32.xlu0 %v921, 16
      %v1094 = vpop.permute.xlu0 %1093
      %1095 = vrot.lane.b32.xlu0 %v922, 16
      %v1096 = vpop.permute.xlu0 %1095
      %1097 = vrot.lane.b32.xlu0 %v923, 16
      %v1098 = vpop.permute.xlu0 %1097
      %1099 = vrot.lane.b32.xlu0 %v924, 16
      %v1100 = vpop.permute.xlu0 %1099
      %1101 = vrot.lane.b32.xlu0 %v925, 16
      %v1102 = vpop.permute.xlu0 %1101
      %1103 = vrot.lane.b32.xlu0 %v926, 16
      %v1104 = vpop.permute.xlu0 %1103
      %1121 = vrot.lane.b32.xlu0 %v1073, 32
      %v1122 = vpop.permute.xlu0 %1121
      %1123 = vrot.lane.b32.xlu0 %v1074, 32
      %v1124 = vpop.permute.xlu0 %1123
      %1125 = vrot.lane.b32.xlu0 %v1075, 32
      %v1126 = vpop.permute.xlu0 %1125
      %1127 = vrot.lane.b32.xlu0 %v1076, 32
      %v1128 = vpop.permute.xlu0 %1127
      %1129 = vrot.lane.b32.xlu0 %v1077, 32
      %v1130 = vpop.permute.xlu0 %1129
      %1131 = vrot.lane.b32.xlu0 %v1078, 32
      %v1132 = vpop.permute.xlu0 %1131
      %1133 = vrot.lane.b32.xlu0 %v1079, 32
      %v1134 = vpop.permute.xlu0 %1133
      %1135 = vrot.lane.b32.xlu0 %v1080, 32
      %v1136 = vpop.permute.xlu0 %1135
      %v1145 = vsel %vm871, %v1049, %v1090
      %v1146 = vsel %vm871, %v1050, %v1092
      %v1147 = vsel %vm871, %v1051, %v1094
      %v1148 = vsel %vm871, %v1052, %v1096
      %v1149 = vsel %vm871, %v1053, %v1098
      %v1150 = vsel %vm871, %v1054, %v1100
      %v1151 = vsel %vm871, %v1055, %v1102
      %v1152 = vsel %vm871, %v1056, %v1104
      %vm1153 = vcmask 261120
      %v1154 = vsel %vm1153, %v1145, %v1122
      %v1155 = vsel %vm1153, %v1146, %v1124
      %v1156 = vsel %vm1153, %v1147, %v1126
      %v1157 = vsel %vm1153, %v1148, %v1128
      %v1158 = vsel %vm1153, %v1149, %v1130
      %v1159 = vsel %vm1153, %v1150, %v1132
      %v1160 = vsel %vm1153, %v1151, %v1134
      %v1161 = vsel %vm1153, %v1152, %v1136
      %v1162 = vld [vmem:[%s3] sm:$0xff]
      %v1163 = vld [vmem:[%s3 + $0x8] sm:$0xff]
      %v1164 = vld [vmem:[%s3 + $0x10] sm:$0xff]
      %v1165 = vld [vmem:[%s3 + $0x18] sm:$0xff]
      %v1166 = vld [vmem:[%s3 + $0x20] sm:$0xff]
      %v1167 = vld [vmem:[%s3 + $0x28] sm:$0xff]
      %v1168 = vld [vmem:[%s4] sm:$0x1]
      %v1170 = vperm.slane %v1168, 0
      %vm1172 = vcmask 392192
      %v1174 = vsel %vm1172, %v1154, 0
      %v1177 = vsel %vm1172, %v1155, 0
      %v1180 = vsel %vm1172, %v1156, 0
      %v1183 = vsel %vm1172, %v1157, 0
      %v1186 = vsel %vm1172, %v1158, 0
      %v1189 = vsel %vm1172, %v1159, 0
      %v1192 = vsel %vm1172, %v1160, 0
      %v1195 = vsel %vm1172, %v1161, 0
      %1197 = vmatpush.msra.mxu0 0.0
      %1198 = vmatpush.msra.mxu0 0.0
      %1199 = vmatpush.msra.mxu0 0.0
      %1200 = vmatpush.msra.mxu0 0.0
      %1201 = vmatpush.msra.mxu0 0.0
      %1202 = vmatpush.msra.mxu0 0.0
      %1203 = vmatpush.msra.mxu0 0.0
      %1204 = vmatpush.msra.mxu0 0.0
      %1205 = vmatpush.msra.mxu0 0.0
      %1206 = vmatpush.msra.mxu0 0.0
      %1207 = vmatpush.msra.mxu0 %v1167
      %1208 = vmatpush.msra.mxu0 %v1166
      %1209 = vmatpush.msra.mxu0 %v1165
      %1210 = vmatpush.msra.mxu0 %v1164
      %1211 = vmatpush.msra.mxu0 %v1163
      %1212 = vmatpush.msra.mxu0 %v1162
      %1213 = vmatmul.f32.gmra.mxu0 %v1174
      %v1214 = vpop.f32.mrf.mxu0
      %v1215 = vadd.f32 %v1170, %v1214
      %1216 = vmatmul.f32.gmra.mxu0 %v1177
      %v1217 = vpop.f32.mrf.mxu0
      %v1218 = vadd.f32 %v1170, %v1217
      %1219 = vmatmul.f32.gmra.mxu0 %v1180
      %v1220 = vpop.f32.mrf.mxu0
      %v1221 = vadd.f32 %v1170, %v1220
      %1222 = vmatmul.f32.gmra.mxu0 %v1183
      %v1223 = vpop.f32.mrf.mxu0
      %v1224 = vadd.f32 %v1170, %v1223
      %1225 = vmatmul.f32.gmra.mxu0 %v1186
      %v1226 = vpop.f32.mrf.mxu0
      %v1227 = vadd.f32 %v1170, %v1226
      %1228 = vmatmul.f32.gmra.mxu0 %v1189
      %v1229 = vpop.f32.mrf.mxu0
      %v1230 = vadd.f32 %v1170, %v1229
      %1231 = vmatmul.f32.gmra.mxu0 %v1192
      %v1232 = vpop.f32.mrf.mxu0
      %v1233 = vadd.f32 %v1170, %v1232
      %1234 = vmatmul.f32.gmra.mxu0 %v1195
      %v1235 = vpop.f32.mrf.mxu0
      %v1236 = vadd.f32 %v1170, %v1235
      %1237 = vdwg.mxu0
      %v1238 = vmax.f32 %v1215, 0.0
      %v1239 = vmax.f32 %v1218, 0.0
      %v1240 = vmax.f32 %v1221, 0.0
      %v1241 = vmax.f32 %v1224, 0.0
      %v1242 = vmax.f32 %v1227, 0.0
      %v1243 = vmax.f32 %v1230, 0.0
      %v1244 = vmax.f32 %v1233, 0.0
      %v1245 = vmax.f32 %v1236, 0.0
      %1246 = vst.msk [vmem:[#allocation5] sm:$0xff] %vm1153, %v1238
      %1247 = vst.msk [vmem:[#allocation5 + $0x8] sm:$0xff] %vm1153, %v1239
      %1248 = vst.msk [vmem:[#allocation5 + $0x10] sm:$0xff] %vm1153, %v1240
      %1249 = vst.msk [vmem:[#allocation5 + $0x18] sm:$0xff] %vm1153, %v1241
      %1250 = vst.msk [vmem:[#allocation5 + $0x20] sm:$0xff] %vm1153, %v1242
      %1251 = vst.msk [vmem:[#allocation5 + $0x28] sm:$0xff] %vm1153, %v1243
      %1252 = vst.msk [vmem:[#allocation5 + $0x30] sm:$0xff] %vm1153, %v1244
      %1253 = vst.msk [vmem:[#allocation5 + $0x38] sm:$0xff] %vm1153, %v1245
      %v1254 = vld [vmem:[#allocation5] ss:$2 sm:$0xff]
      %s1255 = scalar_lea.vmem [#allocation5], 16
      %v1256 = vld [vmem:[%s1255] ss:$2 sm:$0xff]
      %s1257 = scalar_lea.vmem [#allocation5], 32
      %v1258 = vld [vmem:[%s1257] ss:$2 sm:$0xff]
      %s1259 = scalar_lea.vmem [#allocation5], 48
      %v1260 = vld [vmem:[%s1259] ss:$2 sm:$0xff]
      %s1261 = scalar_lea.vmem [#allocation5], 1
      %v1262 = vld [vmem:[%s1261] ss:$2 sm:$0xff]
      %s1263 = scalar_lea.vmem [#allocation5], 17
      %v1264 = vld [vmem:[%s1263] ss:$2 sm:$0xff]
      %s1265 = scalar_lea.vmem [#allocation5], 33
      %v1266 = vld [vmem:[%s1265] ss:$2 sm:$0xff]
      %s1267 = scalar_lea.vmem [#allocation5], 49
      %v1268 = vld [vmem:[%s1267] ss:$2 sm:$0xff]
      %v1269 = vmax.f32 %v1254, %v1262
      %v1270 = vmax.f32 %v1256, %v1264
      %v1271 = vmax.f32 %v1258, %v1266
      %v1272 = vmax.f32 %v1260, %v1268
      %1273 = vxpose.xlu0.b32.start [1/16] %v1269, 128
      %1274 = vxpose.xlu0.b32.cont [2/16] %v1270, 128
      %1275 = vxpose.xlu0.b32.cont [3/16] 0.0, 128
      %1276 = vxpose.xlu0.b32.cont [4/16] 0.0, 128
      %1277 = vxpose.xlu0.b32.cont [5/16] 0.0, 128
      %1278 = vxpose.xlu0.b32.cont [6/16] 0.0, 128
      %1279 = vxpose.xlu0.b32.cont [7/16] 0.0, 128
      %1280 = vxpose.xlu0.b32.cont [8/16] 0.0, 128
      %1281 = vxpose.xlu0.b32.cont [9/16] 0.0, 128
      %1282 = vxpose.xlu0.b32.cont [10/16] 0.0, 128
      %1283 = vxpose.xlu0.b32.cont [11/16] 0.0, 128
      %1284 = vxpose.xlu0.b32.cont [12/16] 0.0, 128
      %1285 = vxpose.xlu0.b32.cont [13/16] 0.0, 128
      %1286 = vxpose.xlu0.b32.cont [14/16] 0.0, 128
      %1287 = vxpose.xlu0.b32.cont [15/16] 0.0, 128
      %1288 = vxpose.xlu0.b32.end [16/16] 0.0, 128
      %v1289 = vpop.trf.xlu0
      %v1290 = vpop.trf.xlu0
      %v1291 = vpop.trf.xlu0
      %v1292 = vpop.trf.xlu0
      %v1293 = vpop.trf.xlu0
      %v1294 = vpop.trf.xlu0
      %v1295 = vpop.trf.xlu0
      %v1296 = vpop.trf.xlu0
      %v1297 = vpop.trf.xlu0
      %v1298 = vpop.trf.xlu0
      %v1299 = vpop.trf.xlu0
      %v1300 = vpop.trf.xlu0
      %v1301 = vpop.trf.xlu0
      %v1302 = vpop.trf.xlu0
      %v1303 = vpop.trf.xlu0
      %v1304 = vpop.trf.xlu0
      %1305 = vst.msk [vmem:[%s228] sm:$0xff] %vm871, %v1289
      %1306 = vst.msk [vmem:[%s228 + $0x8] sm:$0xff] %vm871, %v1290
      %1307 = vst.msk [vmem:[%s228 + $0x10] sm:$0xff] %vm871, %v1291
      %1308 = vst.msk [vmem:[%s228 + $0x18] sm:$0xff] %vm871, %v1292
      %1309 = vxpose.xlu0.b32.start [1/16] %v1271, 128
      %1310 = vxpose.xlu0.b32.cont [2/16] %v1272, 128
      %1311 = vxpose.xlu0.b32.cont [3/16] 0.0, 128
      %1312 = vxpose.xlu0.b32.cont [4/16] 0.0, 128
      %1313 = vxpose.xlu0.b32.cont [5/16] 0.0, 128
      %1314 = vxpose.xlu0.b32.cont [6/16] 0.0, 128
      %1315 = vxpose.xlu0.b32.cont [7/16] 0.0, 128
      %1316 = vxpose.xlu0.b32.cont [8/16] 0.0, 128
      %1317 = vxpose.xlu0.b32.cont [9/16] 0.0, 128
      %1318 = vxpose.xlu0.b32.cont [10/16] 0.0, 128
      %1319 = vxpose.xlu0.b32.cont [11/16] 0.0, 128
      %1320 = vxpose.xlu0.b32.cont [12/16] 0.0, 128
      %1321 = vxpose.xlu0.b32.cont [13/16] 0.0, 128
      %1322 = vxpose.xlu0.b32.cont [14/16] 0.0, 128
      %1323 = vxpose.xlu0.b32.cont [15/16] 0.0, 128
      %1324 = vxpose.xlu0.b32.end [16/16] 0.0, 128
      %v1325 = vpop.trf.xlu0
      %v1326 = vpop.trf.xlu0
      %v1327 = vpop.trf.xlu0
      %v1328 = vpop.trf.xlu0
      %v1329 = vpop.trf.xlu0
      %v1330 = vpop.trf.xlu0
      %v1331 = vpop.trf.xlu0
      %v1332 = vpop.trf.xlu0
      %v1333 = vpop.trf.xlu0
      %v1334 = vpop.trf.xlu0
      %v1335 = vpop.trf.xlu0
      %v1336 = vpop.trf.xlu0
      %v1337 = vpop.trf.xlu0
      %v1338 = vpop.trf.xlu0
      %v1339 = vpop.trf.xlu0
      %v1340 = vpop.trf.xlu0
      %s1341 = scalar_lea.vmem %s228, 32
      %1342 = vst.msk [vmem:[%s1341] sm:$0xff] %vm871, %v1325
      %1343 = vst.msk [vmem:[%s1341 + $0x8] sm:$0xff] %vm871, %v1326
      %1344 = vst.msk [vmem:[%s1341 + $0x10] sm:$0xff] %vm871, %v1327
      %1345 = vst.msk [vmem:[%s1341 + $0x18] sm:$0xff] %vm871, %v1328
      %s1346 = smul.u32 2, %s16
      %p1347 = scmp.lt.s32.totalorder %s1346, 3
      %s1348 = scalar_select %p1347, %s1346, 3
      %s1349 = smul.addr %s1348, 4
      %s1350 = smul.addr %s1349, 8
      %s1351 = scalar_lea.vmem %s5, %s1350
      // Predicated region
      $region41: #{tpu_custom_call.1} parent=39 // pred_check
        %p1352 = pneg %p144
      $region42: #{tpu_custom_call.1} parent=39 // pred_check_branch
        %1354 = sbr.rel (%p1352) target = $region44
      $region43: #{tpu_custom_call.1} parent=39 // pred_region
        %s1355 = smul.u32 2, %s16
      $region44: #{tpu_custom_call.1} parent=39 // pred_fallthru
        _
    $region40: #{tpu_custom_call.1} parent=5 // pred_fallthru
      _
    %p1356 = scmp.le.s32.totalorder 2, %s11
    // Predicated region
    $region45: #{tpu_custom_call.1} parent=5 // pred_check
      %p1357 = pneg %p1356
    $region46: #{tpu_custom_call.1} parent=5 // pred_check_branch
      %1359 = sbr.rel (%p1357) target = $region48
    $region47: #{tpu_custom_call.1} parent=5 // pred_region
      %s1360 = ssub.s32 %s11, 2
      // Predicated region
      $region49: #{tpu_custom_call.1} parent=47 // pred_check
        %p1361 = pneg %p150
      $region50: #{tpu_custom_call.1} parent=47 // pred_check_branch
        %1363 = sbr.rel (%p1361) target = $region52
      $region51: #{tpu_custom_call.1} parent=47 // pred_region
        %s1364 = smul.u32 2, %s17
        %p1365 = scmp.lt.s32.totalorder %s1364, 3
        %s1366 = scalar_select %p1365, %s1364, 3
        %s1367 = smul.addr %s1366, 4
        %s1368 = smul.addr %s1367, 8
        %s1369 = scalar_lea.vmem %s5, %s1368
      $region52: #{tpu_custom_call.1} parent=47 // pred_fallthru
        _
    $region48: #{tpu_custom_call.1} parent=5 // pred_fallthru
      _
  $region6: #{tpu_custom_call.1} parent=0 // loop_footer
    %s15 = sadd.s32 1, %s11
  $region7: #{tpu_custom_call.1} parent=0 // loop_footer_branch
    %10 = sbr.rel target = $region3
  $region8: #{tpu_custom_call.1} parent=0 // loop_exit
    _

</llo_original>
